<compile_context>
chip_gen: v7x
topology: tpu7x:2x2x1
jax: 0.10.0
libtpu: 0.0.40
codegen_flags: <defaults>
</compile_context>

<pallas_src>
import math

import jax
import jax.numpy as jnp
from jax import lax
from jax.experimental import pallas as pl
from jax.experimental.pallas import tpu as pltpu

_EPS = 1e-5
_SLOPE = 0.01  # nn.LeakyReLU default negative_slope


def _conv3x3_as_single_matmul(x_hwc, w_stacked, H, W):
    """3x3 conv (stride 1, pad 1) of one image as a single MXU contraction.

    x_hwc    : (H, W, C) f32 value
    w_stacked: (9*C, Co) f32, rows ordered (kh*3+kw)*C + cin
    returns  : (H*W, Co) f32
    """
    C = x_hwc.shape[-1]
    # zero-pad H and W by 1 via concatenation (no scratch buffer, no lax.pad)
    zrow = jnp.zeros((1, W, C), jnp.float32)
    xv = jnp.concatenate([zrow, x_hwc, zrow], axis=0)          # (H+2, W, C)
    zcol = jnp.zeros((H + 2, 1, C), jnp.float32)
    xp = jnp.concatenate([zcol, xv, zcol], axis=1)             # (H+2, W+2, C)

    # im2col slab: all 9 taps side by side on the lane axis -> one matmul
    taps = []
    for dh in range(3):
        for dw in range(3):
            taps.append(xp[dh:dh + H, dw:dw + W, :])           # (H, W, C)
    slab = jnp.concatenate(taps, axis=-1).reshape(H * W, 9 * C)
    return jnp.dot(slab, w_stacked, preferred_element_type=jnp.float32)


def _conv1_stats_kernel(x_ref, w1_ref, x1raw_ref, ps_ref):
    """Primary 3x3 conv for one batch element + partial BN1 statistics."""
    _, H, W, _ = x_ref.shape
    IC = w1_ref.shape[-1]
    acc = _conv3x3_as_single_matmul(x_ref[0], w1_ref[...], H, W)   # (H*W, IC)
    x1raw_ref[...] = acc.reshape(1, H, W, IC)
    ps_ref[0, 0:1, :] = jnp.sum(acc, axis=0, keepdims=True)
    ps_ref[0, 1:2, :] = jnp.sum(acc * acc, axis=0, keepdims=True)


def _bn1_conv2_stats_kernel(x1raw_ref, s1_ref, t1_ref, w2_ref,
                            x2raw_ref, ps_ref):
    """BN1+LeakyReLU (recomputed cheaply from scale/shift) -> depthwise conv
    (sel folded into dense weights) -> partial BN2 statistics."""
    _, H, W, IC = x1raw_ref.shape
    NC = w2_ref.shape[-1]
    x1 = x1raw_ref[0].reshape(H * W, IC) * s1_ref[...] + t1_ref[...]
    x1 = jnp.where(x1 > 0, x1, _SLOPE * x1)
    acc = _conv3x3_as_single_matmul(x1.reshape(H, W, IC), w2_ref[...], H, W)
    x2raw_ref[...] = acc.reshape(1, H, W, NC)
    ps_ref[0, 0:1, :] = jnp.sum(acc, axis=0, keepdims=True)
    ps_ref[0, 1:2, :] = jnp.sum(acc * acc, axis=0, keepdims=True)


def _finalize_kernel(x1raw_ref, x2raw_ref, s1_ref, t1_ref, s2_ref, t2_ref,
                     out_ref):
    """Normalize both branches and write directly into the output channel
    slices (no concatenate, no [:out_c] slice of a temporary)."""
    _, H, W, IC = x1raw_ref.shape
    NC = x2raw_ref.shape[-1]
    out_c = out_ref.shape[-1]

    x1 = x1raw_ref[0].reshape(H * W, IC) * s1_ref[...] + t1_ref[...]
    x1 = jnp.where(x1 > 0, x1, _SLOPE * x1)
    x2 = x2raw_ref[0].reshape(H * W, NC) * s2_ref[...] + t2_ref[...]
    x2 = jnp.where(x2 > 0, x2, _SLOPE * x2)

    out_ref[0, :, :, :IC] = x1.reshape(H, W, IC)
    out_ref[0, :, :, IC:out_c] = x2[:, :out_c - IC].reshape(H, W, out_c - IC)


def ghost_module_forward(x_nchw, w_conv, w_dw, gamma1, beta1, gamma2, beta2,
                         out_c, ratio=2):
    """Wrapper: NCHW in / NCHW out, parameters in PyTorch layouts."""
    N, in_c, H, W = x_nchw.shape
    init_c = math.ceil(out_c / ratio)
    new_c = init_c * (ratio - 1)
    assert w_conv.shape == (init_c, in_c, 3, 3)
    assert w_dw.shape == (new_c, 1, 3, 3)

    f32 = jnp.float32
    x_nhwc = jnp.transpose(x_nchw, (0, 2, 3, 1)).astype(f32)

    # conv1 weights: (O,I,KH,KW) -> (KH,KW,I,O) -> (9*I, O)   (tap-major rows)
    w1 = jnp.transpose(w_conv, (2, 3, 1, 0)).reshape(9 * in_c, init_c).astype(f32)

    # depthwise weights with the group-selection folded in:
    # dense[kh,kw,cin,cout] = w_dw[cout,0,kh,kw] * (cin == cout // (ratio-1))
    sel = (jnp.arange(new_c)[None, :] // (ratio - 1)
           == jnp.arange(init_c)[:, None]).astype(f32)            # (IC, NC)
    wdw_t = jnp.transpose(w_dw[:, 0, :, :], (1, 2, 0)).astype(f32)  # (3,3,NC)
    w2 = (wdw_t[:, :, None, :] * sel[None, None, :, :]).reshape(9 * init_c, new_c)

    cparams = pltpu.CompilerParams(
        dimension_semantics=("parallel",),          # batch grid -> both TCs on v7x
        vmem_limit_bytes=48 * 1024 * 1024,          # fits v7x 64 MiB with headroom
    )

    # ---- pass 1: conv1 + per-batch partial BN1 stats -------------------------
    x1_raw, ps1 = pl.pallas_call(
        _conv1_stats_kernel,
        grid=(N,),
        out_shape=(jax.ShapeDtypeStruct((N, H, W, init_c), f32),
                   jax.ShapeDtypeStruct((N, 2, init_c), f32)),
        in_specs=[pl.BlockSpec((1, H, W, in_c), lambda n: (n, 0, 0, 0)),
                  pl.BlockSpec((9 * in_c, init_c), lambda n: (0, 0))],
        out_specs=(pl.BlockSpec((1, H, W, init_c), lambda n: (n, 0, 0, 0)),
                   pl.BlockSpec((1, 2, init_c), lambda n: (n, 0, 0))),
        compiler_params=cparams,
    )(x_nhwc, w1)

    M = float(N * H * W)
    mean1 = jnp.sum(ps1[:, 0, :], axis=0) / M
    var1 = jnp.sum(ps1[:, 1, :], axis=0) / M - mean1 * mean1
    scale1 = gamma1.astype(f32) * lax.rsqrt(var1 + _EPS)
    shift1 = beta1.astype(f32) - mean1 * scale1
    s1 = scale1.reshape(1, init_c)
    t1 = shift1.reshape(1, init_c)

    # ---- pass 2: BN1+LeakyReLU, depthwise conv, partial BN2 stats ------------
    x2_raw, ps2 = pl.pallas_call(
        _bn1_conv2_stats_kernel,
        grid=(N,),
        out_shape=(jax.ShapeDtypeStruct((N, H, W, new_c), f32),
                   jax.ShapeDtypeStruct((N, 2, new_c), f32)),
        in_specs=[pl.BlockSpec((1, H, W, init_c), lambda n: (n, 0, 0, 0)),
                  pl.BlockSpec((1, init_c), lambda n: (0, 0)),
                  pl.BlockSpec((1, init_c), lambda n: (0, 0)),
                  pl.BlockSpec((9 * init_c, new_c), lambda n: (0, 0))],
        out_specs=(pl.BlockSpec((1, H, W, new_c), lambda n: (n, 0, 0, 0)),
                   pl.BlockSpec((1, 2, new_c), lambda n: (n, 0, 0))),
        compiler_params=cparams,
    )(x1_raw, s1, t1, w2)

    mean2 = jnp.sum(ps2[:, 0, :], axis=0) / M
    var2 = jnp.sum(ps2[:, 1, :], axis=0) / M - mean2 * mean2
    scale2 = gamma2.astype(f32) * lax.rsqrt(var2 + _EPS)
    shift2 = beta2.astype(f32) - mean2 * scale2
    s2 = scale2.reshape(1, new_c)
    t2 = shift2.reshape(1, new_c)

    # ---- pass 3: normalize both branches, write concatenated output ----------
    out_nhwc = pl.pallas_call(
        _finalize_kernel,
        grid=(N,),
        out_shape=jax.ShapeDtypeStruct((N, H, W, out_c), f32),
        in_specs=[pl.BlockSpec((1, H, W, init_c), lambda n: (n, 0, 0, 0)),
                  pl.BlockSpec((1, H, W, new_c), lambda n: (n, 0, 0, 0)),
                  pl.BlockSpec((1, init_c), lambda n: (0, 0)),
                  pl.BlockSpec((1, init_c), lambda n: (0, 0)),
                  pl.BlockSpec((1, new_c), lambda n: (0, 0)),
                  pl.BlockSpec((1, new_c), lambda n: (0, 0))],
        out_specs=pl.BlockSpec((1, H, W, out_c), lambda n: (n, 0, 0, 0)),
        compiler_params=cparams,
    )(x1_raw, x2_raw, s1, t1, s2, t2)

    return jnp.transpose(out_nhwc, (0, 3, 1, 2))


def _ref_ghost(x_nchw, w_conv, w_dw, g1, b1, g2, b2, out_c, ratio=2):
    """Pure-JAX reference reproducing the PyTorch forward (training-mode BN)."""
    init_c = math.ceil(out_c / ratio)

    def bn_lrelu(x, g, b):
        m = jnp.mean(x, axis=(0, 2, 3), keepdims=True)
        v = jnp.mean((x - m) ** 2, axis=(0, 2, 3), keepdims=True)
        y = (x - m) * lax.rsqrt(v + _EPS) * g.reshape(1, -1, 1, 1) \
            + b.reshape(1, -1, 1, 1)
        return jnp.where(y > 0, y, _SLOPE * y)

    x1 = lax.conv_general_dilated(x_nchw, w_conv, (1, 1), 'SAME',
                                  dimension_numbers=('NCHW', 'OIHW', 'NCHW'))
    x1 = bn_lrelu(x1, g1, b1)
    x2 = lax.conv_general_dilated(x1, w_dw, (1, 1), 'SAME',
                                  dimension_numbers=('NCHW', 'OIHW', 'NCHW'),
                                  feature_group_count=init_c)
    x2 = bn_lrelu(x2, g2, b2)
    return jnp.concatenate([x1, x2], axis=1)[:, :out_c]


if __name__ == "__main__":
    key = jax.random.PRNGKey(0)
    N, in_c, H, W = 2, 4, 16, 16
    out_c, ratio = 8, 2
    init_c = math.ceil(out_c / ratio)
    new_c = init_c * (ratio - 1)

    kx, kw1, kw2, kg1, kb1, kg2, kb2 = jax.random.split(key, 7)
    x = jax.random.normal(kx, (N, in_c, H, W), jnp.float32)
    w_conv = 0.2 * jax.random.normal(kw1, (init_c, in_c, 3, 3), jnp.float32)
    w_dw = 0.2 * jax.random.normal(kw2, (new_c, 1, 3, 3), jnp.float32)
    g1 = 1.0 + 0.1 * jax.random.normal(kg1, (init_c,), jnp.float32)
    b1 = 0.1 * jax.random.normal(kb1, (init_c,), jnp.float32)
    g2 = 1.0 + 0.1 * jax.random.normal(kg2, (new_c,), jnp.float32)
    b2 = 0.1 * jax.random.normal(kb2, (new_c,), jnp.float32)

    out = ghost_module_forward(x, w_conv, w_dw, g1, b1, g2, b2, out_c, ratio)
    out = jax.block_until_ready(out)
    assert out.shape == (N, out_c, H, W)

    ref = _ref_ghost(x, w_conv, w_dw, g1, b1, g2, b2, out_c, ratio)
    assert jnp.allclose(out, ref, atol=1e-4, rtol=1e-4), \
        float(jnp.max(jnp.abs(out - ref)))

    print("KERNEL_OK")
</pallas_src>

<mosaic_0001>
module attributes {stable_mosaic.version = 11 : i64} {
  func.func @_conv1_stats_kernel(%arg0: i32, %arg1: memref<1x16x16x4xf32, #tpu.memory_space<vmem>>, %arg2: memref<36x4xf32, #tpu.memory_space<vmem>>, %arg3: memref<1x16x16x4xf32, #tpu.memory_space<vmem>>, %arg4: memref<1x2x4xf32, #tpu.memory_space<vmem>>) attributes {dimension_semantics = [#tpu.dimension_semantics<parallel>], iteration_bounds = array<i64: 2>, scalar_prefetch = 0 : i64, scratch_operands = 0 : i64, tpu.core_type = #tpu.core_type<tc>, window_params = [{transform_indices = @transform_0, window_bounds = array<i64: 1, 16, 16, 4>}, {pipeline_mode = #tpu.pipeline_mode<synchronous>, transform_indices = @transform_1, window_bounds = array<i64: 36, 4>}, {transform_indices = @transform_2, window_bounds = array<i64: 1, 16, 16, 4>}, {transform_indices = @transform_3, window_bounds = array<i64: 1, 2, 4>}]} {
    %c0 = arith.constant 0 : index
    %c0_0 = arith.constant 0 : index
    %c0_1 = arith.constant 0 : index
    %c0_2 = arith.constant 0 : index
    %0 = vector.load %arg1[%c0, %c0_0, %c0_1, %c0_2] : memref<1x16x16x4xf32, #tpu.memory_space<vmem>>, vector<1x16x16x4xf32>
    %1 = vector.shape_cast %0 : vector<1x16x16x4xf32> to vector<16x16x4xf32>
    %c0_3 = arith.constant 0 : index
    %c0_4 = arith.constant 0 : index
    %2 = vector.load %arg2[%c0_3, %c0_4] : memref<36x4xf32, #tpu.memory_space<vmem>>, vector<36x4xf32>
    %cst = arith.constant 0.000000e+00 : f32
    %3 = vector.broadcast %cst : f32 to vector<1x16x4xf32>
    %4 = tpu.concatenate %3, %1, %3 in 0 : vector<1x16x4xf32>, vector<16x16x4xf32>, vector<1x16x4xf32> -> vector<18x16x4xf32>
    %cst_5 = arith.constant 0.000000e+00 : f32
    %5 = vector.broadcast %cst_5 : f32 to vector<18x1x4xf32>
    %6 = tpu.concatenate %5, %4, %5 in 1 : vector<18x1x4xf32>, vector<18x16x4xf32>, vector<18x1x4xf32> -> vector<18x18x4xf32>
    %7 = vector.extract_strided_slice %6 {offsets = [0, 0, 0], sizes = [16, 16, 4], strides = [1, 1, 1]} : vector<18x18x4xf32> to vector<16x16x4xf32>
    %8 = vector.extract_strided_slice %6 {offsets = [0, 1, 0], sizes = [16, 16, 4], strides = [1, 1, 1]} : vector<18x18x4xf32> to vector<16x16x4xf32>
    %9 = vector.extract_strided_slice %6 {offsets = [0, 2, 0], sizes = [16, 16, 4], strides = [1, 1, 1]} : vector<18x18x4xf32> to vector<16x16x4xf32>
    %10 = vector.extract_strided_slice %6 {offsets = [1, 0, 0], sizes = [16, 16, 4], strides = [1, 1, 1]} : vector<18x18x4xf32> to vector<16x16x4xf32>
    %11 = vector.extract_strided_slice %6 {offsets = [1, 1, 0], sizes = [16, 16, 4], strides = [1, 1, 1]} : vector<18x18x4xf32> to vector<16x16x4xf32>
    %12 = vector.extract_strided_slice %6 {offsets = [1, 2, 0], sizes = [16, 16, 4], strides = [1, 1, 1]} : vector<18x18x4xf32> to vector<16x16x4xf32>
    %13 = vector.extract_strided_slice %6 {offsets = [2, 0, 0], sizes = [16, 16, 4], strides = [1, 1, 1]} : vector<18x18x4xf32> to vector<16x16x4xf32>
    %14 = vector.extract_strided_slice %6 {offsets = [2, 1, 0], sizes = [16, 16, 4], strides = [1, 1, 1]} : vector<18x18x4xf32> to vector<16x16x4xf32>
    %15 = vector.extract_strided_slice %6 {offsets = [2, 2, 0], sizes = [16, 16, 4], strides = [1, 1, 1]} : vector<18x18x4xf32> to vector<16x16x4xf32>
    %16 = tpu.concatenate %7, %8, %9, %10, %11, %12, %13, %14, %15 in 2 : vector<16x16x4xf32>, vector<16x16x4xf32>, vector<16x16x4xf32>, vector<16x16x4xf32>, vector<16x16x4xf32>, vector<16x16x4xf32>, vector<16x16x4xf32>, vector<16x16x4xf32>, vector<16x16x4xf32> -> vector<16x16x36xf32>
    %17 = vector.shape_cast %16 : vector<16x16x36xf32> to vector<256x36xf32>
    %cst_6 = arith.constant dense<0.000000e+00> : vector<256x4xf32>
    %18 = tpu.matmul %17, %2, %cst_6 {dimension_numbers = #tpu.dot_dimension_numbers<[1], [0], [0], [1], [0, 0, 1, 1], [], []>} : vector<256x36xf32>, vector<36x4xf32>, vector<256x4xf32> -> vector<256x4xf32>
    %19 = vector.shape_cast %18 : vector<256x4xf32> to vector<1x16x16x4xf32>
    %c0_7 = arith.constant 0 : index
    %c0_8 = arith.constant 0 : index
    %c0_9 = arith.constant 0 : index
    %c0_10 = arith.constant 0 : index
    %20 = vector.load %arg3[%c0_7, %c0_8, %c0_9, %c0_10] : memref<1x16x16x4xf32, #tpu.memory_space<vmem>>, vector<1x16x16x4xf32>
    tpu.vector_store %arg3[%c0_7, %c0_8, %c0_9, %c0_10], %19 {strides = array<i32>} : memref<1x16x16x4xf32, #tpu.memory_space<vmem>>, vector<1x16x16x4xf32>,
    %cst_11 = arith.constant dense<0.000000e+00> : vector<4xf32>
    %21 = vector.multi_reduction <add>, %18, %cst_11 [0] : vector<256x4xf32> to vector<4xf32>
    %22 = vector.shape_cast %21 : vector<4xf32> to vector<1x4xf32>
    %c0_12 = arith.constant 0 : index
    %c0_13 = arith.constant 0 : index
    %c0_14 = arith.constant 0 : index
    %23 = vector.load %arg4[%c0_12, %c0_13, %c0_14] : memref<1x2x4xf32, #tpu.memory_space<vmem>>, vector<1x1x4xf32>
    %24 = vector.shape_cast %23 : vector<1x1x4xf32> to vector<1x4xf32>
    %25 = vector.shape_cast %22 : vector<1x4xf32> to vector<1x1x4xf32>
    tpu.vector_store %arg4[%c0_12, %c0_13, %c0_14], %25 {strides = array<i32>} : memref<1x2x4xf32, #tpu.memory_space<vmem>>, vector<1x1x4xf32>,
    %26 = arith.mulf %18, %18 : vector<256x4xf32>
    %cst_15 = arith.constant dense<0.000000e+00> : vector<4xf32>
    %27 = vector.multi_reduction <add>, %26, %cst_15 [0] : vector<256x4xf32> to vector<4xf32>
    %28 = vector.shape_cast %27 : vector<4xf32> to vector<1x4xf32>
    %c0_16 = arith.constant 0 : index
    %c1 = arith.constant 1 : index
    %c0_17 = arith.constant 0 : index
    %29 = vector.load %arg4[%c0_16, %c1, %c0_17] : memref<1x2x4xf32, #tpu.memory_space<vmem>>, vector<1x1x4xf32>
    %30 = vector.shape_cast %29 : vector<1x1x4xf32> to vector<1x4xf32>
    %31 = vector.shape_cast %28 : vector<1x4xf32> to vector<1x1x4xf32>
    tpu.vector_store %arg4[%c0_16, %c1, %c0_17], %31 {strides = array<i32>} : memref<1x2x4xf32, #tpu.memory_space<vmem>>, vector<1x1x4xf32>,
    return
  }
  func.func @transform_0(%arg0: i32) -> (i32, i32, i32, i32) {
    %c0_i32 = arith.constant 0 : i32
    %c0_i32_0 = arith.constant 0 : i32
    %c0_i32_1 = arith.constant 0 : i32
    %c0_i32_2 = arith.constant 0 : i32
    return %arg0, %c0_i32, %c0_i32_0, %c0_i32_1 : i32, i32, i32, i32
  }
  func.func @transform_1(%arg0: i32) -> (i32, i32) {
    %c0_i32 = arith.constant 0 : i32
    %c0_i32_0 = arith.constant 0 : i32
    %c0_i32_1 = arith.constant 0 : i32
    return %c0_i32, %c0_i32_0 : i32, i32
  }
  func.func @transform_2(%arg0: i32) -> (i32, i32, i32, i32) {
    %c0_i32 = arith.constant 0 : i32
    %c0_i32_0 = arith.constant 0 : i32
    %c0_i32_1 = arith.constant 0 : i32
    %c0_i32_2 = arith.constant 0 : i32
    return %arg0, %c0_i32, %c0_i32_0, %c0_i32_1 : i32, i32, i32, i32
  }
  func.func @transform_3(%arg0: i32) -> (i32, i32, i32) {
    %c0_i32 = arith.constant 0 : i32
    %c0_i32_0 = arith.constant 0 : i32
    %c0_i32_1 = arith.constant 0 : i32
    return %arg0, %c0_i32, %c0_i32_0 : i32, i32, i32
  }
}

</mosaic_0001>

<llo_original>
// kernel: tpu_custom_call.1
$region0: #{tpu_custom_call.1}
  #allocation0 [shape = 'u32[]', space=smem, size = 0x4, offset = 0x4, fixed_abs, tag = 'smem constant byte address 0x4 - core index']
  #allocation1 [shape = 'u32[144,128]{1,0:T(1,128)}', space=vmem, size = 0x12000, scoped, tag = 'internal scratch']
  %s0 = inlined_call_operand.vmem [shape: f32[2,16,16,4], index: 0, kind: input, shape index: {}]
  %s1 = inlined_call_operand.vmem [shape: f32[36,4], index: 1, kind: input, shape index: {}]
  %s2 = inlined_call_operand.vmem [shape: f32[2,16,16,4], index: 2, kind: output, shape index: {0}]
  %s3 = inlined_call_operand.hbm [shape: f32[2,2,4], index: 3, kind: output, shape index: {1}]
  %4 = xla_tuple %s2, %s3
  %s5 = sld [smem:[#allocation0]]
  $region49: #{tpu_custom_call.1} parent=0
    _
  %s7 = ssub.s32 1, %s5
  %s8 = scalar_select 0, %s7, %s5
  $region1: #{tpu_custom_call.1} parent=0
    #allocation2 [shape = 'u8[2048]{0}', space=vmem, size = 0x800, scoped, tag = 'output window, operand 1']
    #allocation3 [shape = 's32[2]{0}', space=sflag, size = 0x8, scoped, tag = 'scoped memory for tpu_custom_call.1']
    %9 = vsyncpa [#allocation3], 0
    %s10 = scalar_lea.sflag [#allocation3], 1
    %11 = vsyncpa %s10, 0
    loop: start=0, step=1, limit=4
    $region2: #{tpu_custom_call.1} parent=1 // loop_pre_header
      _
    $region3: #{tpu_custom_call.1} parent=1 // loop_header
      %s13 = sphi 0, %s17
      %p14 = scmp.ge.s32.totalorder %s13, 4
      %s23 = sphi 0, %s25
      %s26 = sphi 0, %s23
      %s27 = sphi 0, %s26
      %s43 = sphi 0, %s27
      %s47 = sphi 0, %s47
      %s49 = sphi 0, %s47
      %s50 = sphi 0, %s49
      %s64 = sphi 0, %s50
      %s70 = sphi 0, %s72
      %s73 = sphi 0, %s70
      %s74 = sphi 0, %s73
      %s90 = sphi 0, %s74
      %s96 = sphi 0, %s98
      %s99 = sphi 0, %s96
      %s100 = sphi 0, %s99
      %s116 = sphi 0, %s100
    $region4: #{tpu_custom_call.1} parent=1 // loop_header_branch
      %16 = sbr.rel (%p14) target = $region8
    $region5: #{tpu_custom_call.1} parent=1 // loop_body
      %s18 = ssub.s32 %s13, 1
      %s19 = ssub.s32 %s13, 2
      %s20 = sadd.s32 %s13, 1
      %s21 = ssub.s32 %s13, %s20
      %p22 = scmp.eq.s32.totalorder %s21, 0
      %s24 = sadd.s32 %s23, 1
      %s25 = scalar_select %p22, %s23, %s24
      %p28 = pneg %p22
      %p29 = scmp.eq.s32.totalorder %s13, 1
      %p30 = por %p28, %p29
      %p31 = scmp.ne.s32.totalorder %s23, %s26
      %p32 = scmp.eq.s32.totalorder %s13, 0
      %p33 = por %p31, %p32
      %p34 = scmp.ne.s32.totalorder %s23, %s26
      %p35 = scmp.eq.s32.totalorder %s18, 1
      %p36 = por %p34, %p35
      %p37 = scmp.ne.s32.totalorder %s26, %s27
      %p38 = scmp.eq.s32.totalorder %s18, 0
      %p39 = por %p37, %p38
      %p40 = scmp.ne.s32.totalorder %s26, %s27
      %p41 = scmp.eq.s32.totalorder %s19, 1
      %p42 = por %p40, %p41
      %p44 = scmp.ne.s32.totalorder %s27, %s43
      %p45 = scmp.eq.s32.totalorder %s19, 0
      %p46 = por %p44, %p45
      %s48 = sadd.s32 %s47, 1
      %p51 = scmp.eq.s32.totalorder %s13, 1
      %p52 = scmp.ne.s32.totalorder %s47, %s49
      %p53 = scmp.eq.s32.totalorder %s13, 0
      %p54 = por %p52, %p53
      %p55 = scmp.ne.s32.totalorder %s47, %s49
      %p56 = scmp.eq.s32.totalorder %s18, 1
      %p57 = por %p55, %p56
      %p58 = scmp.ne.s32.totalorder %s49, %s50
      %p59 = scmp.eq.s32.totalorder %s18, 0
      %p60 = por %p58, %p59
      %p61 = scmp.ne.s32.totalorder %s49, %s50
      %p62 = scmp.eq.s32.totalorder %s19, 1
      %p63 = por %p61, %p62
      %p65 = scmp.ne.s32.totalorder %s50, %s64
      %p66 = scmp.eq.s32.totalorder %s19, 0
      %p67 = por %p65, %p66
      %s68 = ssub.s32 %s13, %s20
      %p69 = scmp.eq.s32.totalorder %s68, 0
      %s71 = sadd.s32 %s70, 1
      %s72 = scalar_select %p69, %s70, %s71
      %p75 = pneg %p69
      %p76 = scmp.eq.s32.totalorder %s13, 1
      %p77 = por %p75, %p76
      %p78 = scmp.ne.s32.totalorder %s70, %s73
      %p79 = scmp.eq.s32.totalorder %s13, 0
      %p80 = por %p78, %p79
      %p81 = scmp.ne.s32.totalorder %s70, %s73
      %p82 = scmp.eq.s32.totalorder %s18, 1
      %p83 = por %p81, %p82
      %p84 = scmp.ne.s32.totalorder %s73, %s74
      %p85 = scmp.eq.s32.totalorder %s18, 0
      %p86 = por %p84, %p85
      %p87 = scmp.ne.s32.totalorder %s73, %s74
      %p88 = scmp.eq.s32.totalorder %s19, 1
      %p89 = por %p87, %p88
      %p91 = scmp.ne.s32.totalorder %s74, %s90
      %p92 = scmp.eq.s32.totalorder %s19, 0
      %p93 = por %p91, %p92
      %s94 = ssub.s32 %s13, %s20
      %p95 = scmp.eq.s32.totalorder %s94, 0
      %s97 = sadd.s32 %s96, 1
      %s98 = scalar_select %p95, %s96, %s97
      %p101 = pneg %p95
      %p102 = scmp.eq.s32.totalorder %s13, 1
      %p103 = por %p101, %p102
      %p104 = scmp.ne.s32.totalorder %s96, %s99
      %p105 = scmp.eq.s32.totalorder %s13, 0
      %p106 = por %p104, %p105
      %p107 = scmp.ne.s32.totalorder %s96, %s99
      %p108 = scmp.eq.s32.totalorder %s18, 1
      %p109 = por %p107, %p108
      %p110 = scmp.ne.s32.totalorder %s99, %s100
      %p111 = scmp.eq.s32.totalorder %s18, 0
      %p112 = por %p110, %p111
      %p113 = scmp.ne.s32.totalorder %s99, %s100
      %p114 = scmp.eq.s32.totalorder %s19, 1
      %p115 = por %p113, %p114
      %p117 = scmp.ne.s32.totalorder %s100, %s116
      %p118 = scmp.eq.s32.totalorder %s19, 0
      %p119 = por %p117, %p118
      %p120 = scmp.le.s32.totalorder 1, %s13
      %p121 = scmp.lt.s32.totalorder %s13, 3
      %p122 = pnand %p120, %p121
      %p123 = pneg %p122
      // Predicated region
      $region9: #{tpu_custom_call.1} parent=5 // pred_check
        _
      $region10: #{tpu_custom_call.1} parent=5 // pred_check_branch
        %125 = sbr.rel (%p122) target = $region12
      $region11: #{tpu_custom_call.1} parent=5 // pred_region
        %s126 = ssub.s32 %s13, 1
        // Predicated region
        $region13: #{tpu_custom_call.1} parent=11 // pred_check
          %p127 = pneg %p60
        $region14: #{tpu_custom_call.1} parent=11 // pred_check_branch
          %129 = sbr.rel (%p127) target = $region16
        $region15: #{tpu_custom_call.1} parent=11 // pred_region
          _
        $region16: #{tpu_custom_call.1} parent=11 // pred_fallthru
          _
      $region12: #{tpu_custom_call.1} parent=5 // pred_fallthru
        _
      %p130 = scmp.lt.s32.totalorder %s13, 2
      // Predicated region
      $region17: #{tpu_custom_call.1} parent=5 // pred_check
        %p131 = pneg %p130
      $region18: #{tpu_custom_call.1} parent=5 // pred_check_branch
        %133 = sbr.rel (%p131) target = $region20
      $region19: #{tpu_custom_call.1} parent=5 // pred_region
        // Predicated region
        $region21: #{tpu_custom_call.1} parent=19 // pred_check
          %p134 = pneg %p33
        $region22: #{tpu_custom_call.1} parent=19 // pred_check_branch
          %136 = sbr.rel (%p134) target = $region24
        $region23: #{tpu_custom_call.1} parent=19 // pred_region
          %p137 = scmp.lt.s32.totalorder %s13, 1
          %s138 = scalar_select %p137, %s13, 1
          %s139 = smul.addr %s138, 32
          %s140 = smul.addr %s139, 8
          %s141 = scalar_lea.vmem %s0, %s140
        $region24: #{tpu_custom_call.1} parent=19 // pred_fallthru
          _
      $region20: #{tpu_custom_call.1} parent=5 // pred_fallthru
        _
      %p142 = scmp.le.s32.totalorder 1, %s13
      %p143 = scmp.lt.s32.totalorder %s13, 3
      %p144 = pnand %p142, %p143
      %p145 = pneg %p144
      // Predicated region
      $region25: #{tpu_custom_call.1} parent=5 // pred_check
        _
      $region26: #{tpu_custom_call.1} parent=5 // pred_check_branch
        %147 = sbr.rel (%p144) target = $region28
      $region27: #{tpu_custom_call.1} parent=5 // pred_region
        %s148 = ssub.s32 %s13, 1
        %p149 = scmp.lt.s32.totalorder %s18, 1
        %s150 = scalar_select %p149, %s18, 1
        %s151 = smul.addr %s150, 32
        %s152 = smul.addr %s151, 8
        %s153 = scalar_lea.vmem %s0, %s152
        %p154 = pneg %p39
        %p155 = pneg %p36
        %p156 = pneg %p60
        %p157 = pneg %p57
        %p158 = pneg %p86
        %p159 = pneg %p83
        %p160 = scmp.lt.s32.totalorder %s18, 1
        %s161 = scalar_select %p160, %s18, 1
        %s162 = smul.addr %s161, 32
        %s163 = smul.addr %s162, 8
        %s164 = scalar_lea.vmem %s2, %s163
        %p165 = pneg %p112
        %p166 = pneg %p109
        %s167 = sand.u32 %s99, 1
        %s168 = scalar_lea.sflag [#allocation3], %s167
        %s169 = sand.u32 %s99, 1
        %s170 = smul.addr %s169, 2
        %s171 = scalar_lea.vmem [#allocation2], %s170
        %p172 = scmp.lt.s32.totalorder %s18, 1
        %s173 = scalar_select %p172, %s18, 1
        %s174 = smul.addr %s173, 32
        %s175 = smul.addr %s174, 8
        %s176 = scalar_lea.vmem %s0, %s175
        %p177 = scmp.lt.s32.totalorder %s18, 1
        %s178 = scalar_select %p177, %s18, 1
        %s179 = smul.addr %s178, 32
        %s180 = smul.addr %s179, 8
        %s181 = scalar_lea.vmem %s2, %s180
        %v182 = vld [vmem:[%s176] sm:$0xff]
        %v183 = vld [vmem:[%s176 + $0x8] sm:$0xff]
        %v184 = vld [vmem:[%s176 + $0x10] sm:$0xff]
        %v185 = vld [vmem:[%s176 + $0x18] sm:$0xff]
        %v186 = vld [vmem:[%s176 + $0x20] sm:$0xff]
        %v187 = vld [vmem:[%s176 + $0x28] sm:$0xff]
        %v188 = vld [vmem:[%s176 + $0x30] sm:$0xff]
        %v189 = vld [vmem:[%s176 + $0x38] sm:$0xff]
        %v190 = vld [vmem:[%s176 + $0x40] sm:$0xff]
        %v191 = vld [vmem:[%s176 + $0x48] sm:$0xff]
        %v192 = vld [vmem:[%s176 + $0x50] sm:$0xff]
        %v193 = vld [vmem:[%s176 + $0x58] sm:$0xff]
        %v194 = vld [vmem:[%s176 + $0x60] sm:$0xff]
        %v195 = vld [vmem:[%s176 + $0x68] sm:$0xff]
        %v196 = vld [vmem:[%s176 + $0x70] sm:$0xff]
        %v197 = vld [vmem:[%s176 + $0x78] sm:$0xff]
        %v198 = vld [vmem:[%s176 + $0x80] sm:$0xff]
        %v199 = vld [vmem:[%s176 + $0x88] sm:$0xff]
        %v200 = vld [vmem:[%s176 + $0x90] sm:$0xff]
        %v201 = vld [vmem:[%s176 + $0x98] sm:$0xff]
        %v202 = vld [vmem:[%s176 + $0xa0] sm:$0xff]
        %v203 = vld [vmem:[%s176 + $0xa8] sm:$0xff]
        %v204 = vld [vmem:[%s176 + $0xb0] sm:$0xff]
        %v205 = vld [vmem:[%s176 + $0xb8] sm:$0xff]
        %v206 = vld [vmem:[%s176 + $0xc0] sm:$0xff]
        %v207 = vld [vmem:[%s176 + $0xc8] sm:$0xff]
        %v208 = vld [vmem:[%s176 + $0xd0] sm:$0xff]
        %v209 = vld [vmem:[%s176 + $0xd8] sm:$0xff]
        %v210 = vld [vmem:[%s176 + $0xe0] sm:$0xff]
        %v211 = vld [vmem:[%s176 + $0xe8] sm:$0xff]
        %v212 = vld [vmem:[%s176 + $0xf0] sm:$0xff]
        %v213 = vld [vmem:[%s176 + $0xf8] sm:$0xff]
        %v214 = vld [vmem:[%s1] sm:$0xff]
        %v215 = vld [vmem:[%s1 + $0x8] sm:$0xff]
        %v216 = vld [vmem:[%s1 + $0x10] sm:$0xff]
        %v217 = vld [vmem:[%s1 + $0x18] sm:$0xff]
        %v218 = vld [vmem:[%s1 + $0x20] sm:$0xf]
        %vm252 = vcmask 1040384
        %v253 = vrot.slane 0.0, 7
        %v254 = vsel %vm252, %v253, %v253
        %v255 = vrot.slane %v182, 7
        %v256 = vrot.slane %v183, 7
        %v257 = vsel %vm252, %v255, %v256
        %v258 = vrot.slane %v184, 7
        %v259 = vrot.slane %v185, 7
        %v260 = vsel %vm252, %v258, %v259
        %v261 = vrot.slane %v186, 7
        %v262 = vrot.slane %v187, 7
        %v263 = vsel %vm252, %v261, %v262
        %v264 = vrot.slane %v188, 7
        %v265 = vrot.slane %v189, 7
        %v266 = vsel %vm252, %v264, %v265
        %v267 = vrot.slane %v190, 7
        %v268 = vrot.slane %v191, 7
        %v269 = vsel %vm252, %v267, %v268
        %v270 = vrot.slane %v192, 7
        %v271 = vrot.slane %v193, 7
        %v272 = vsel %vm252, %v270, %v271
        %v273 = vrot.slane %v194, 7
        %v274 = vrot.slane %v195, 7
        %v275 = vsel %vm252, %v273, %v274
        %v276 = vrot.slane %v196, 7
        %v277 = vrot.slane %v197, 7
        %v278 = vsel %vm252, %v276, %v277
        %v279 = vrot.slane %v198, 7
        %v280 = vrot.slane %v199, 7
        %v281 = vsel %vm252, %v279, %v280
        %v282 = vrot.slane %v200, 7
        %v283 = vrot.slane %v201, 7
        %v284 = vsel %vm252, %v282, %v283
        %v285 = vrot.slane %v202, 7
        %v286 = vrot.slane %v203, 7
        %v287 = vsel %vm252, %v285, %v286
        %v288 = vrot.slane %v204, 7
        %v289 = vrot.slane %v205, 7
        %v290 = vsel %vm252, %v288, %v289
        %v291 = vrot.slane %v206, 7
        %v292 = vrot.slane %v207, 7
        %v293 = vsel %vm252, %v291, %v292
        %v294 = vrot.slane %v208, 7
        %v295 = vrot.slane %v209, 7
        %v296 = vsel %vm252, %v294, %v295
        %v297 = vrot.slane %v210, 7
        %v298 = vrot.slane %v211, 7
        %v299 = vsel %vm252, %v297, %v298
        %v300 = vrot.slane %v212, 7
        %v301 = vrot.slane %v213, 7
        %v302 = vsel %vm252, %v300, %v301
        %v352 = vsel %vm252, 0.0, %v253
        %v353 = vsel %vm252, 0.0, %v255
        %v354 = vsel %vm252, 0.0, %v258
        %v355 = vsel %vm252, 0.0, %v261
        %v356 = vsel %vm252, 0.0, %v264
        %v357 = vsel %vm252, 0.0, %v267
        %v358 = vsel %vm252, 0.0, %v270
        %v359 = vsel %vm252, 0.0, %v273
        %v360 = vsel %vm252, 0.0, %v276
        %v361 = vsel %vm252, 0.0, %v279
        %v362 = vsel %vm252, 0.0, %v282
        %v363 = vsel %vm252, 0.0, %v285
        %v364 = vsel %vm252, 0.0, %v288
        %v365 = vsel %vm252, 0.0, %v291
        %v366 = vsel %vm252, 0.0, %v294
        %v367 = vsel %vm252, 0.0, %v297
        %v368 = vsel %vm252, 0.0, %v300
        %v369 = vsel %vm252, %v253, 0.0
        %v370 = vsel %vm252, %v256, 0.0
        %v371 = vsel %vm252, %v259, 0.0
        %v372 = vsel %vm252, %v262, 0.0
        %v373 = vsel %vm252, %v265, 0.0
        %v374 = vsel %vm252, %v268, 0.0
        %v375 = vsel %vm252, %v271, 0.0
        %v376 = vsel %vm252, %v274, 0.0
        %v377 = vsel %vm252, %v277, 0.0
        %v378 = vsel %vm252, %v280, 0.0
        %v379 = vsel %vm252, %v283, 0.0
        %v380 = vsel %vm252, %v286, 0.0
        %v381 = vsel %vm252, %v289, 0.0
        %v382 = vsel %vm252, %v292, 0.0
        %v383 = vsel %vm252, %v295, 0.0
        %v384 = vsel %vm252, %v298, 0.0
        %v385 = vsel %vm252, %v301, 0.0
        %vm418 = vcmask 1046528
        %v419 = vrot.slane %v352, 1
        %v420 = vrot.slane %v254, 1
        %v421 = vsel %vm418, %v419, %v420
        %v422 = vrot.slane %v369, 1
        %v423 = vsel %vm418, %v420, %v422
        %v424 = vrot.slane %v353, 1
        %v425 = vrot.slane %v257, 1
        %v426 = vsel %vm418, %v424, %v425
        %v427 = vrot.slane %v370, 1
        %v428 = vsel %vm418, %v425, %v427
        %v429 = vrot.slane %v354, 1
        %v430 = vrot.slane %v260, 1
        %v431 = vsel %vm418, %v429, %v430
        %v432 = vrot.slane %v371, 1
        %v433 = vsel %vm418, %v430, %v432
        %v434 = vrot.slane %v355, 1
        %v435 = vrot.slane %v263, 1
        %v436 = vsel %vm418, %v434, %v435
        %v437 = vrot.slane %v372, 1
        %v438 = vsel %vm418, %v435, %v437
        %v439 = vrot.slane %v356, 1
        %v440 = vrot.slane %v266, 1
        %v441 = vsel %vm418, %v439, %v440
        %v442 = vrot.slane %v373, 1
        %v443 = vsel %vm418, %v440, %v442
        %v444 = vrot.slane %v357, 1
        %v445 = vrot.slane %v269, 1
        %v446 = vsel %vm418, %v444, %v445
        %v447 = vrot.slane %v374, 1
        %v448 = vsel %vm418, %v445, %v447
        %v449 = vrot.slane %v358, 1
        %v450 = vrot.slane %v272, 1
        %v451 = vsel %vm418, %v449, %v450
        %v452 = vrot.slane %v375, 1
        %v453 = vsel %vm418, %v450, %v452
        %v454 = vrot.slane %v359, 1
        %v455 = vrot.slane %v275, 1
        %v456 = vsel %vm418, %v454, %v455
        %v457 = vrot.slane %v376, 1
        %v458 = vsel %vm418, %v455, %v457
        %v459 = vrot.slane %v360, 1
        %v460 = vrot.slane %v278, 1
        %v461 = vsel %vm418, %v459, %v460
        %v462 = vrot.slane %v377, 1
        %v463 = vsel %vm418, %v460, %v462
        %v464 = vrot.slane %v361, 1
        %v465 = vrot.slane %v281, 1
        %v466 = vsel %vm418, %v464, %v465
        %v467 = vrot.slane %v378, 1
        %v468 = vsel %vm418, %v465, %v467
        %v469 = vrot.slane %v362, 1
        %v470 = vrot.slane %v284, 1
        %v471 = vsel %vm418, %v469, %v470
        %v472 = vrot.slane %v379, 1
        %v473 = vsel %vm418, %v470, %v472
        %v474 = vrot.slane %v363, 1
        %v475 = vrot.slane %v287, 1
        %v476 = vsel %vm418, %v474, %v475
        %v477 = vrot.slane %v380, 1
        %v478 = vsel %vm418, %v475, %v477
        %v479 = vrot.slane %v364, 1
        %v480 = vrot.slane %v290, 1
        %v481 = vsel %vm418, %v479, %v480
        %v482 = vrot.slane %v381, 1
        %v483 = vsel %vm418, %v480, %v482
        %v484 = vrot.slane %v365, 1
        %v485 = vrot.slane %v293, 1
        %v486 = vsel %vm418, %v484, %v485
        %v487 = vrot.slane %v382, 1
        %v488 = vsel %vm418, %v485, %v487
        %v489 = vrot.slane %v366, 1
        %v490 = vrot.slane %v296, 1
        %v491 = vsel %vm418, %v489, %v490
        %v492 = vrot.slane %v383, 1
        %v493 = vsel %vm418, %v490, %v492
        %v494 = vrot.slane %v367, 1
        %v495 = vrot.slane %v299, 1
        %v496 = vsel %vm418, %v494, %v495
        %v497 = vrot.slane %v384, 1
        %v498 = vsel %vm418, %v495, %v497
        %499 = vrot.lane.b32.xlu0 %v421, 4
        %v500 = vpop.permute.xlu0 %499
        %501 = vrot.lane.b32.xlu0 %v423, 4
        %v502 = vpop.permute.xlu0 %501
        %503 = vrot.lane.b32.xlu0 %v426, 4
        %v504 = vpop.permute.xlu0 %503
        %505 = vrot.lane.b32.xlu0 %v428, 4
        %v506 = vpop.permute.xlu0 %505
        %507 = vrot.lane.b32.xlu0 %v431, 4
        %v508 = vpop.permute.xlu0 %507
        %509 = vrot.lane.b32.xlu0 %v433, 4
        %v510 = vpop.permute.xlu0 %509
        %511 = vrot.lane.b32.xlu0 %v436, 4
        %v512 = vpop.permute.xlu0 %511
        %513 = vrot.lane.b32.xlu0 %v438, 4
        %v514 = vpop.permute.xlu0 %513
        %515 = vrot.lane.b32.xlu0 %v441, 4
        %v516 = vpop.permute.xlu0 %515
        %517 = vrot.lane.b32.xlu0 %v443, 4
        %v518 = vpop.permute.xlu0 %517
        %519 = vrot.lane.b32.xlu0 %v446, 4
        %v520 = vpop.permute.xlu0 %519
        %521 = vrot.lane.b32.xlu0 %v448, 4
        %v522 = vpop.permute.xlu0 %521
        %523 = vrot.lane.b32.xlu0 %v451, 4
        %v524 = vpop.permute.xlu0 %523
        %525 = vrot.lane.b32.xlu0 %v453, 4
        %v526 = vpop.permute.xlu0 %525
        %527 = vrot.lane.b32.xlu0 %v456, 4
        %v528 = vpop.permute.xlu0 %527
        %529 = vrot.lane.b32.xlu0 %v458, 4
        %v530 = vpop.permute.xlu0 %529
        %531 = vrot.lane.b32.xlu0 %v461, 4
        %v532 = vpop.permute.xlu0 %531
        %533 = vrot.lane.b32.xlu0 %v463, 4
        %v534 = vpop.permute.xlu0 %533
        %535 = vrot.lane.b32.xlu0 %v466, 4
        %v536 = vpop.permute.xlu0 %535
        %537 = vrot.lane.b32.xlu0 %v468, 4
        %v538 = vpop.permute.xlu0 %537
        %539 = vrot.lane.b32.xlu0 %v471, 4
        %v540 = vpop.permute.xlu0 %539
        %541 = vrot.lane.b32.xlu0 %v473, 4
        %v542 = vpop.permute.xlu0 %541
        %543 = vrot.lane.b32.xlu0 %v476, 4
        %v544 = vpop.permute.xlu0 %543
        %545 = vrot.lane.b32.xlu0 %v478, 4
        %v546 = vpop.permute.xlu0 %545
        %547 = vrot.lane.b32.xlu0 %v481, 4
        %v548 = vpop.permute.xlu0 %547
        %549 = vrot.lane.b32.xlu0 %v483, 4
        %v550 = vpop.permute.xlu0 %549
        %551 = vrot.lane.b32.xlu0 %v486, 4
        %v552 = vpop.permute.xlu0 %551
        %553 = vrot.lane.b32.xlu0 %v488, 4
        %v554 = vpop.permute.xlu0 %553
        %555 = vrot.lane.b32.xlu0 %v491, 4
        %v556 = vpop.permute.xlu0 %555
        %557 = vrot.lane.b32.xlu0 %v493, 4
        %v558 = vpop.permute.xlu0 %557
        %559 = vrot.lane.b32.xlu0 %v496, 4
        %v560 = vpop.permute.xlu0 %559
        %561 = vrot.lane.b32.xlu0 %v498, 4
        %v562 = vpop.permute.xlu0 %561
        %vm595 = vcmask 1045504
        %v596 = vrot.slane %v352, 2
        %v597 = vrot.slane %v254, 2
        %v598 = vsel %vm595, %v596, %v597
        %v599 = vrot.slane %v369, 2
        %v600 = vsel %vm595, %v597, %v599
        %v601 = vrot.slane %v353, 2
        %v602 = vrot.slane %v257, 2
        %v603 = vsel %vm595, %v601, %v602
        %v604 = vrot.slane %v370, 2
        %v605 = vsel %vm595, %v602, %v604
        %v606 = vrot.slane %v354, 2
        %v607 = vrot.slane %v260, 2
        %v608 = vsel %vm595, %v606, %v607
        %v609 = vrot.slane %v371, 2
        %v610 = vsel %vm595, %v607, %v609
        %v611 = vrot.slane %v355, 2
        %v612 = vrot.slane %v263, 2
        %v613 = vsel %vm595, %v611, %v612
        %v614 = vrot.slane %v372, 2
        %v615 = vsel %vm595, %v612, %v614
        %v616 = vrot.slane %v356, 2
        %v617 = vrot.slane %v266, 2
        %v618 = vsel %vm595, %v616, %v617
        %v619 = vrot.slane %v373, 2
        %v620 = vsel %vm595, %v617, %v619
        %v621 = vrot.slane %v357, 2
        %v622 = vrot.slane %v269, 2
        %v623 = vsel %vm595, %v621, %v622
        %v624 = vrot.slane %v374, 2
        %v625 = vsel %vm595, %v622, %v624
        %v626 = vrot.slane %v358, 2
        %v627 = vrot.slane %v272, 2
        %v628 = vsel %vm595, %v626, %v627
        %v629 = vrot.slane %v375, 2
        %v630 = vsel %vm595, %v627, %v629
        %v631 = vrot.slane %v359, 2
        %v632 = vrot.slane %v275, 2
        %v633 = vsel %vm595, %v631, %v632
        %v634 = vrot.slane %v376, 2
        %v635 = vsel %vm595, %v632, %v634
        %v636 = vrot.slane %v360, 2
        %v637 = vrot.slane %v278, 2
        %v638 = vsel %vm595, %v636, %v637
        %v639 = vrot.slane %v377, 2
        %v640 = vsel %vm595, %v637, %v639
        %v641 = vrot.slane %v361, 2
        %v642 = vrot.slane %v281, 2
        %v643 = vsel %vm595, %v641, %v642
        %v644 = vrot.slane %v378, 2
        %v645 = vsel %vm595, %v642, %v644
        %v646 = vrot.slane %v362, 2
        %v647 = vrot.slane %v284, 2
        %v648 = vsel %vm595, %v646, %v647
        %v649 = vrot.slane %v379, 2
        %v650 = vsel %vm595, %v647, %v649
        %v651 = vrot.slane %v363, 2
        %v652 = vrot.slane %v287, 2
        %v653 = vsel %vm595, %v651, %v652
        %v654 = vrot.slane %v380, 2
        %v655 = vsel %vm595, %v652, %v654
        %v656 = vrot.slane %v364, 2
        %v657 = vrot.slane %v290, 2
        %v658 = vsel %vm595, %v656, %v657
        %v659 = vrot.slane %v381, 2
        %v660 = vsel %vm595, %v657, %v659
        %v661 = vrot.slane %v365, 2
        %v662 = vrot.slane %v293, 2
        %v663 = vsel %vm595, %v661, %v662
        %v664 = vrot.slane %v382, 2
        %v665 = vsel %vm595, %v662, %v664
        %v666 = vrot.slane %v366, 2
        %v667 = vrot.slane %v296, 2
        %v668 = vsel %vm595, %v666, %v667
        %v669 = vrot.slane %v383, 2
        %v670 = vsel %vm595, %v667, %v669
        %v671 = vrot.slane %v367, 2
        %v672 = vrot.slane %v299, 2
        %v673 = vsel %vm595, %v671, %v672
        %v674 = vrot.slane %v384, 2
        %v675 = vsel %vm595, %v672, %v674
        %676 = vrot.lane.b32.xlu0 %v598, 8
        %v677 = vpop.permute.xlu0 %676
        %678 = vrot.lane.b32.xlu0 %v600, 8
        %v679 = vpop.permute.xlu0 %678
        %680 = vrot.lane.b32.xlu0 %v603, 8
        %v681 = vpop.permute.xlu0 %680
        %682 = vrot.lane.b32.xlu0 %v605, 8
        %v683 = vpop.permute.xlu0 %682
        %684 = vrot.lane.b32.xlu0 %v608, 8
        %v685 = vpop.permute.xlu0 %684
        %686 = vrot.lane.b32.xlu0 %v610, 8
        %v687 = vpop.permute.xlu0 %686
        %688 = vrot.lane.b32.xlu0 %v613, 8
        %v689 = vpop.permute.xlu0 %688
        %690 = vrot.lane.b32.xlu0 %v615, 8
        %v691 = vpop.permute.xlu0 %690
        %692 = vrot.lane.b32.xlu0 %v618, 8
        %v693 = vpop.permute.xlu0 %692
        %694 = vrot.lane.b32.xlu0 %v620, 8
        %v695 = vpop.permute.xlu0 %694
        %696 = vrot.lane.b32.xlu0 %v623, 8
        %v697 = vpop.permute.xlu0 %696
        %698 = vrot.lane.b32.xlu0 %v625, 8
        %v699 = vpop.permute.xlu0 %698
        %700 = vrot.lane.b32.xlu0 %v628, 8
        %v701 = vpop.permute.xlu0 %700
        %702 = vrot.lane.b32.xlu0 %v630, 8
        %v703 = vpop.permute.xlu0 %702
        %704 = vrot.lane.b32.xlu0 %v633, 8
        %v705 = vpop.permute.xlu0 %704
        %706 = vrot.lane.b32.xlu0 %v635, 8
        %v707 = vpop.permute.xlu0 %706
        %708 = vrot.lane.b32.xlu0 %v638, 8
        %v709 = vpop.permute.xlu0 %708
        %710 = vrot.lane.b32.xlu0 %v640, 8
        %v711 = vpop.permute.xlu0 %710
        %712 = vrot.lane.b32.xlu0 %v643, 8
        %v713 = vpop.permute.xlu0 %712
        %714 = vrot.lane.b32.xlu0 %v645, 8
        %v715 = vpop.permute.xlu0 %714
        %716 = vrot.lane.b32.xlu0 %v648, 8
        %v717 = vpop.permute.xlu0 %716
        %718 = vrot.lane.b32.xlu0 %v650, 8
        %v719 = vpop.permute.xlu0 %718
        %720 = vrot.lane.b32.xlu0 %v653, 8
        %v721 = vpop.permute.xlu0 %720
        %722 = vrot.lane.b32.xlu0 %v655, 8
        %v723 = vpop.permute.xlu0 %722
        %724 = vrot.lane.b32.xlu0 %v658, 8
        %v725 = vpop.permute.xlu0 %724
        %726 = vrot.lane.b32.xlu0 %v660, 8
        %v727 = vpop.permute.xlu0 %726
        %728 = vrot.lane.b32.xlu0 %v663, 8
        %v729 = vpop.permute.xlu0 %728
        %730 = vrot.lane.b32.xlu0 %v665, 8
        %v731 = vpop.permute.xlu0 %730
        %732 = vrot.lane.b32.xlu0 %v668, 8
        %v733 = vpop.permute.xlu0 %732
        %734 = vrot.lane.b32.xlu0 %v670, 8
        %v735 = vpop.permute.xlu0 %734
        %736 = vrot.lane.b32.xlu0 %v673, 8
        %v737 = vpop.permute.xlu0 %736
        %738 = vrot.lane.b32.xlu0 %v675, 8
        %v739 = vpop.permute.xlu0 %738
        %773 = vrot.lane.b32.xlu0 %v353, 12
        %v774 = vpop.permute.xlu0 %773
        %775 = vrot.lane.b32.xlu0 %v257, 12
        %v776 = vpop.permute.xlu0 %775
        %777 = vrot.lane.b32.xlu0 %v354, 12
        %v778 = vpop.permute.xlu0 %777
        %779 = vrot.lane.b32.xlu0 %v260, 12
        %v780 = vpop.permute.xlu0 %779
        %781 = vrot.lane.b32.xlu0 %v355, 12
        %v782 = vpop.permute.xlu0 %781
        %783 = vrot.lane.b32.xlu0 %v263, 12
        %v784 = vpop.permute.xlu0 %783
        %785 = vrot.lane.b32.xlu0 %v356, 12
        %v786 = vpop.permute.xlu0 %785
        %787 = vrot.lane.b32.xlu0 %v266, 12
        %v788 = vpop.permute.xlu0 %787
        %789 = vrot.lane.b32.xlu0 %v357, 12
        %v790 = vpop.permute.xlu0 %789
        %791 = vrot.lane.b32.xlu0 %v269, 12
        %v792 = vpop.permute.xlu0 %791
        %793 = vrot.lane.b32.xlu0 %v358, 12
        %v794 = vpop.permute.xlu0 %793
        %795 = vrot.lane.b32.xlu0 %v272, 12
        %v796 = vpop.permute.xlu0 %795
        %797 = vrot.lane.b32.xlu0 %v359, 12
        %v798 = vpop.permute.xlu0 %797
        %799 = vrot.lane.b32.xlu0 %v275, 12
        %v800 = vpop.permute.xlu0 %799
        %801 = vrot.lane.b32.xlu0 %v360, 12
        %v802 = vpop.permute.xlu0 %801
        %803 = vrot.lane.b32.xlu0 %v278, 12
        %v804 = vpop.permute.xlu0 %803
        %805 = vrot.lane.b32.xlu0 %v361, 12
        %v806 = vpop.permute.xlu0 %805
        %807 = vrot.lane.b32.xlu0 %v281, 12
        %v808 = vpop.permute.xlu0 %807
        %809 = vrot.lane.b32.xlu0 %v362, 12
        %v810 = vpop.permute.xlu0 %809
        %811 = vrot.lane.b32.xlu0 %v284, 12
        %v812 = vpop.permute.xlu0 %811
        %813 = vrot.lane.b32.xlu0 %v363, 12
        %v814 = vpop.permute.xlu0 %813
        %815 = vrot.lane.b32.xlu0 %v287, 12
        %v816 = vpop.permute.xlu0 %815
        %817 = vrot.lane.b32.xlu0 %v364, 12
        %v818 = vpop.permute.xlu0 %817
        %819 = vrot.lane.b32.xlu0 %v290, 12
        %v820 = vpop.permute.xlu0 %819
        %821 = vrot.lane.b32.xlu0 %v365, 12
        %v822 = vpop.permute.xlu0 %821
        %823 = vrot.lane.b32.xlu0 %v293, 12
        %v824 = vpop.permute.xlu0 %823
        %825 = vrot.lane.b32.xlu0 %v366, 12
        %v826 = vpop.permute.xlu0 %825
        %827 = vrot.lane.b32.xlu0 %v296, 12
        %v828 = vpop.permute.xlu0 %827
        %829 = vrot.lane.b32.xlu0 %v367, 12
        %v830 = vpop.permute.xlu0 %829
        %831 = vrot.lane.b32.xlu0 %v299, 12
        %v832 = vpop.permute.xlu0 %831
        %833 = vrot.lane.b32.xlu0 %v368, 12
        %v834 = vpop.permute.xlu0 %833
        %835 = vrot.lane.b32.xlu0 %v302, 12
        %v836 = vpop.permute.xlu0 %835
        %v870 = vrot.slane %v368, 1
        %v871 = vrot.slane %v302, 1
        %v872 = vsel %vm418, %v870, %v871
        %v873 = vrot.slane %v385, 1
        %v874 = vsel %vm418, %v871, %v873
        %875 = vrot.lane.b32.xlu0 %v426, 16
        %v876 = vpop.permute.xlu0 %875
        %877 = vrot.lane.b32.xlu0 %v428, 16
        %v878 = vpop.permute.xlu0 %877
        %879 = vrot.lane.b32.xlu0 %v431, 16
        %v880 = vpop.permute.xlu0 %879
        %881 = vrot.lane.b32.xlu0 %v433, 16
        %v882 = vpop.permute.xlu0 %881
        %883 = vrot.lane.b32.xlu0 %v436, 16
        %v884 = vpop.permute.xlu0 %883
        %885 = vrot.lane.b32.xlu0 %v438, 16
        %v886 = vpop.permute.xlu0 %885
        %887 = vrot.lane.b32.xlu0 %v441, 16
        %v888 = vpop.permute.xlu0 %887
        %889 = vrot.lane.b32.xlu0 %v443, 16
        %v890 = vpop.permute.xlu0 %889
        %891 = vrot.lane.b32.xlu0 %v446, 16
        %v892 = vpop.permute.xlu0 %891
        %893 = vrot.lane.b32.xlu0 %v448, 16
        %v894 = vpop.permute.xlu0 %893
        %895 = vrot.lane.b32.xlu0 %v451, 16
        %v896 = vpop.permute.xlu0 %895
        %897 = vrot.lane.b32.xlu0 %v453, 16
        %v898 = vpop.permute.xlu0 %897
        %899 = vrot.lane.b32.xlu0 %v456, 16
        %v900 = vpop.permute.xlu0 %899
        %901 = vrot.lane.b32.xlu0 %v458, 16
        %v902 = vpop.permute.xlu0 %901
        %903 = vrot.lane.b32.xlu0 %v461, 16
        %v904 = vpop.permute.xlu0 %903
        %905 = vrot.lane.b32.xlu0 %v463, 16
        %v906 = vpop.permute.xlu0 %905
        %907 = vrot.lane.b32.xlu0 %v466, 16
        %v908 = vpop.permute.xlu0 %907
        %909 = vrot.lane.b32.xlu0 %v468, 16
        %v910 = vpop.permute.xlu0 %909
        %911 = vrot.lane.b32.xlu0 %v471, 16
        %v912 = vpop.permute.xlu0 %911
        %913 = vrot.lane.b32.xlu0 %v473, 16
        %v914 = vpop.permute.xlu0 %913
        %915 = vrot.lane.b32.xlu0 %v476, 16
        %v916 = vpop.permute.xlu0 %915
        %917 = vrot.lane.b32.xlu0 %v478, 16
        %v918 = vpop.permute.xlu0 %917
        %919 = vrot.lane.b32.xlu0 %v481, 16
        %v920 = vpop.permute.xlu0 %919
        %921 = vrot.lane.b32.xlu0 %v483, 16
        %v922 = vpop.permute.xlu0 %921
        %923 = vrot.lane.b32.xlu0 %v486, 16
        %v924 = vpop.permute.xlu0 %923
        %925 = vrot.lane.b32.xlu0 %v488, 16
        %v926 = vpop.permute.xlu0 %925
        %927 = vrot.lane.b32.xlu0 %v491, 16
        %v928 = vpop.permute.xlu0 %927
        %929 = vrot.lane.b32.xlu0 %v493, 16
        %v930 = vpop.permute.xlu0 %929
        %931 = vrot.lane.b32.xlu0 %v496, 16
        %v932 = vpop.permute.xlu0 %931
        %933 = vrot.lane.b32.xlu0 %v498, 16
        %v934 = vpop.permute.xlu0 %933
        %935 = vrot.lane.b32.xlu0 %v872, 16
        %v936 = vpop.permute.xlu0 %935
        %937 = vrot.lane.b32.xlu0 %v874, 16
        %v938 = vpop.permute.xlu0 %937
        %v971 = vrot.slane %v368, 2
        %v972 = vrot.slane %v302, 2
        %v973 = vsel %vm595, %v971, %v972
        %v974 = vrot.slane %v385, 2
        %v975 = vsel %vm595, %v972, %v974
        %976 = vrot.lane.b32.xlu0 %v603, 20
        %v977 = vpop.permute.xlu0 %976
        %978 = vrot.lane.b32.xlu0 %v605, 20
        %v979 = vpop.permute.xlu0 %978
        %980 = vrot.lane.b32.xlu0 %v608, 20
        %v981 = vpop.permute.xlu0 %980
        %982 = vrot.lane.b32.xlu0 %v610, 20
        %v983 = vpop.permute.xlu0 %982
        %984 = vrot.lane.b32.xlu0 %v613, 20
        %v985 = vpop.permute.xlu0 %984
        %986 = vrot.lane.b32.xlu0 %v615, 20
        %v987 = vpop.permute.xlu0 %986
        %988 = vrot.lane.b32.xlu0 %v618, 20
        %v989 = vpop.permute.xlu0 %988
        %990 = vrot.lane.b32.xlu0 %v620, 20
        %v991 = vpop.permute.xlu0 %990
        %992 = vrot.lane.b32.xlu0 %v623, 20
        %v993 = vpop.permute.xlu0 %992
        %994 = vrot.lane.b32.xlu0 %v625, 20
        %v995 = vpop.permute.xlu0 %994
        %996 = vrot.lane.b32.xlu0 %v628, 20
        %v997 = vpop.permute.xlu0 %996
        %998 = vrot.lane.b32.xlu0 %v630, 20
        %v999 = vpop.permute.xlu0 %998
        %1000 = vrot.lane.b32.xlu0 %v633, 20
        %v1001 = vpop.permute.xlu0 %1000
        %1002 = vrot.lane.b32.xlu0 %v635, 20
        %v1003 = vpop.permute.xlu0 %1002
        %1004 = vrot.lane.b32.xlu0 %v638, 20
        %v1005 = vpop.permute.xlu0 %1004
        %1006 = vrot.lane.b32.xlu0 %v640, 20
        %v1007 = vpop.permute.xlu0 %1006
        %1008 = vrot.lane.b32.xlu0 %v643, 20
        %v1009 = vpop.permute.xlu0 %1008
        %1010 = vrot.lane.b32.xlu0 %v645, 20
        %v1011 = vpop.permute.xlu0 %1010
        %1012 = vrot.lane.b32.xlu0 %v648, 20
        %v1013 = vpop.permute.xlu0 %1012
        %1014 = vrot.lane.b32.xlu0 %v650, 20
        %v1015 = vpop.permute.xlu0 %1014
        %1016 = vrot.lane.b32.xlu0 %v653, 20
        %v1017 = vpop.permute.xlu0 %1016
        %1018 = vrot.lane.b32.xlu0 %v655, 20
        %v1019 = vpop.permute.xlu0 %1018
        %1020 = vrot.lane.b32.xlu0 %v658, 20
        %v1021 = vpop.permute.xlu0 %1020
        %1022 = vrot.lane.b32.xlu0 %v660, 20
        %v1023 = vpop.permute.xlu0 %1022
        %1024 = vrot.lane.b32.xlu0 %v663, 20
        %v1025 = vpop.permute.xlu0 %1024
        %1026 = vrot.lane.b32.xlu0 %v665, 20
        %v1027 = vpop.permute.xlu0 %1026
        %1028 = vrot.lane.b32.xlu0 %v668, 20
        %v1029 = vpop.permute.xlu0 %1028
        %1030 = vrot.lane.b32.xlu0 %v670, 20
        %v1031 = vpop.permute.xlu0 %1030
        %1032 = vrot.lane.b32.xlu0 %v673, 20
        %v1033 = vpop.permute.xlu0 %1032
        %1034 = vrot.lane.b32.xlu0 %v675, 20
        %v1035 = vpop.permute.xlu0 %1034
        %1036 = vrot.lane.b32.xlu0 %v973, 20
        %v1037 = vpop.permute.xlu0 %1036
        %1038 = vrot.lane.b32.xlu0 %v975, 20
        %v1039 = vpop.permute.xlu0 %1038
        %1072 = vrot.lane.b32.xlu0 %v354, 24
        %v1073 = vpop.permute.xlu0 %1072
        %1074 = vrot.lane.b32.xlu0 %v260, 24
        %v1075 = vpop.permute.xlu0 %1074
        %1076 = vrot.lane.b32.xlu0 %v355, 24
        %v1077 = vpop.permute.xlu0 %1076
        %1078 = vrot.lane.b32.xlu0 %v263, 24
        %v1079 = vpop.permute.xlu0 %1078
        %1080 = vrot.lane.b32.xlu0 %v356, 24
        %v1081 = vpop.permute.xlu0 %1080
        %1082 = vrot.lane.b32.xlu0 %v266, 24
        %v1083 = vpop.permute.xlu0 %1082
        %1084 = vrot.lane.b32.xlu0 %v357, 24
        %v1085 = vpop.permute.xlu0 %1084
        %1086 = vrot.lane.b32.xlu0 %v269, 24
        %v1087 = vpop.permute.xlu0 %1086
        %1088 = vrot.lane.b32.xlu0 %v358, 24
        %v1089 = vpop.permute.xlu0 %1088
        %1090 = vrot.lane.b32.xlu0 %v272, 24
        %v1091 = vpop.permute.xlu0 %1090
        %1092 = vrot.lane.b32.xlu0 %v359, 24
        %v1093 = vpop.permute.xlu0 %1092
        %1094 = vrot.lane.b32.xlu0 %v275, 24
        %v1095 = vpop.permute.xlu0 %1094
        %1096 = vrot.lane.b32.xlu0 %v360, 24
        %v1097 = vpop.permute.xlu0 %1096
        %1098 = vrot.lane.b32.xlu0 %v278, 24
        %v1099 = vpop.permute.xlu0 %1098
        %1100 = vrot.lane.b32.xlu0 %v361, 24
        %v1101 = vpop.permute.xlu0 %1100
        %1102 = vrot.lane.b32.xlu0 %v281, 24
        %v1103 = vpop.permute.xlu0 %1102
        %1104 = vrot.lane.b32.xlu0 %v362, 24
        %v1105 = vpop.permute.xlu0 %1104
        %1106 = vrot.lane.b32.xlu0 %v284, 24
        %v1107 = vpop.permute.xlu0 %1106
        %1108 = vrot.lane.b32.xlu0 %v363, 24
        %v1109 = vpop.permute.xlu0 %1108
        %1110 = vrot.lane.b32.xlu0 %v287, 24
        %v1111 = vpop.permute.xlu0 %1110
        %1112 = vrot.lane.b32.xlu0 %v364, 24
        %v1113 = vpop.permute.xlu0 %1112
        %1114 = vrot.lane.b32.xlu0 %v290, 24
        %v1115 = vpop.permute.xlu0 %1114
        %1116 = vrot.lane.b32.xlu0 %v365, 24
        %v1117 = vpop.permute.xlu0 %1116
        %1118 = vrot.lane.b32.xlu0 %v293, 24
        %v1119 = vpop.permute.xlu0 %1118
        %1120 = vrot.lane.b32.xlu0 %v366, 24
        %v1121 = vpop.permute.xlu0 %1120
        %1122 = vrot.lane.b32.xlu0 %v296, 24
        %v1123 = vpop.permute.xlu0 %1122
        %1124 = vrot.lane.b32.xlu0 %v367, 24
        %v1125 = vpop.permute.xlu0 %1124
        %1126 = vrot.lane.b32.xlu0 %v299, 24
        %v1127 = vpop.permute.xlu0 %1126
        %1128 = vrot.lane.b32.xlu0 %v368, 24
        %v1129 = vpop.permute.xlu0 %1128
        %1130 = vrot.lane.b32.xlu0 %v302, 24
        %v1131 = vpop.permute.xlu0 %1130
        %1132 = vrot.lane.b32.xlu0 %v352, 24
        %v1133 = vpop.permute.xlu0 %1132
        %1134 = vrot.lane.b32.xlu0 %v254, 24
        %v1135 = vpop.permute.xlu0 %1134
        %1168 = vrot.lane.b32.xlu0 %v431, 28
        %v1169 = vpop.permute.xlu0 %1168
        %1170 = vrot.lane.b32.xlu0 %v433, 28
        %v1171 = vpop.permute.xlu0 %1170
        %1172 = vrot.lane.b32.xlu0 %v436, 28
        %v1173 = vpop.permute.xlu0 %1172
        %1174 = vrot.lane.b32.xlu0 %v438, 28
        %v1175 = vpop.permute.xlu0 %1174
        %1176 = vrot.lane.b32.xlu0 %v441, 28
        %v1177 = vpop.permute.xlu0 %1176
        %1178 = vrot.lane.b32.xlu0 %v443, 28
        %v1179 = vpop.permute.xlu0 %1178
        %1180 = vrot.lane.b32.xlu0 %v446, 28
        %v1181 = vpop.permute.xlu0 %1180
        %1182 = vrot.lane.b32.xlu0 %v448, 28
        %v1183 = vpop.permute.xlu0 %1182
        %1184 = vrot.lane.b32.xlu0 %v451, 28
        %v1185 = vpop.permute.xlu0 %1184
        %1186 = vrot.lane.b32.xlu0 %v453, 28
        %v1187 = vpop.permute.xlu0 %1186
        %1188 = vrot.lane.b32.xlu0 %v456, 28
        %v1189 = vpop.permute.xlu0 %1188
        %1190 = vrot.lane.b32.xlu0 %v458, 28
        %v1191 = vpop.permute.xlu0 %1190
        %1192 = vrot.lane.b32.xlu0 %v461, 28
        %v1193 = vpop.permute.xlu0 %1192
        %1194 = vrot.lane.b32.xlu0 %v463, 28
        %v1195 = vpop.permute.xlu0 %1194
        %1196 = vrot.lane.b32.xlu0 %v466, 28
        %v1197 = vpop.permute.xlu0 %1196
        %1198 = vrot.lane.b32.xlu0 %v468, 28
        %v1199 = vpop.permute.xlu0 %1198
        %1200 = vrot.lane.b32.xlu0 %v471, 28
        %v1201 = vpop.permute.xlu0 %1200
        %1202 = vrot.lane.b32.xlu0 %v473, 28
        %v1203 = vpop.permute.xlu0 %1202
        %1204 = vrot.lane.b32.xlu0 %v476, 28
        %v1205 = vpop.permute.xlu0 %1204
        %1206 = vrot.lane.b32.xlu0 %v478, 28
        %v1207 = vpop.permute.xlu0 %1206
        %1208 = vrot.lane.b32.xlu0 %v481, 28
        %v1209 = vpop.permute.xlu0 %1208
        %1210 = vrot.lane.b32.xlu0 %v483, 28
        %v1211 = vpop.permute.xlu0 %1210
        %1212 = vrot.lane.b32.xlu0 %v486, 28
        %v1213 = vpop.permute.xlu0 %1212
        %1214 = vrot.lane.b32.xlu0 %v488, 28
        %v1215 = vpop.permute.xlu0 %1214
        %1216 = vrot.lane.b32.xlu0 %v491, 28
        %v1217 = vpop.permute.xlu0 %1216
        %1218 = vrot.lane.b32.xlu0 %v493, 28
        %v1219 = vpop.permute.xlu0 %1218
        %1220 = vrot.lane.b32.xlu0 %v496, 28
        %v1221 = vpop.permute.xlu0 %1220
        %1222 = vrot.lane.b32.xlu0 %v498, 28
        %v1223 = vpop.permute.xlu0 %1222
        %1224 = vrot.lane.b32.xlu0 %v872, 28
        %v1225 = vpop.permute.xlu0 %1224
        %1226 = vrot.lane.b32.xlu0 %v874, 28
        %v1227 = vpop.permute.xlu0 %1226
        %1228 = vrot.lane.b32.xlu0 %v421, 28
        %v1229 = vpop.permute.xlu0 %1228
        %1230 = vrot.lane.b32.xlu0 %v423, 28
        %v1231 = vpop.permute.xlu0 %1230
        %1264 = vrot.lane.b32.xlu0 %v608, 32
        %v1265 = vpop.permute.xlu0 %1264
        %1266 = vrot.lane.b32.xlu0 %v610, 32
        %v1267 = vpop.permute.xlu0 %1266
        %1268 = vrot.lane.b32.xlu0 %v613, 32
        %v1269 = vpop.permute.xlu0 %1268
        %1270 = vrot.lane.b32.xlu0 %v615, 32
        %v1271 = vpop.permute.xlu0 %1270
        %1272 = vrot.lane.b32.xlu0 %v618, 32
        %v1273 = vpop.permute.xlu0 %1272
        %1274 = vrot.lane.b32.xlu0 %v620, 32
        %v1275 = vpop.permute.xlu0 %1274
        %1276 = vrot.lane.b32.xlu0 %v623, 32
        %v1277 = vpop.permute.xlu0 %1276
        %1278 = vrot.lane.b32.xlu0 %v625, 32
        %v1279 = vpop.permute.xlu0 %1278
        %1280 = vrot.lane.b32.xlu0 %v628, 32
        %v1281 = vpop.permute.xlu0 %1280
        %1282 = vrot.lane.b32.xlu0 %v630, 32
        %v1283 = vpop.permute.xlu0 %1282
        %1284 = vrot.lane.b32.xlu0 %v633, 32
        %v1285 = vpop.permute.xlu0 %1284
        %1286 = vrot.lane.b32.xlu0 %v635, 32
        %v1287 = vpop.permute.xlu0 %1286
        %1288 = vrot.lane.b32.xlu0 %v638, 32
        %v1289 = vpop.permute.xlu0 %1288
        %1290 = vrot.lane.b32.xlu0 %v640, 32
        %v1291 = vpop.permute.xlu0 %1290
        %1292 = vrot.lane.b32.xlu0 %v643, 32
        %v1293 = vpop.permute.xlu0 %1292
        %1294 = vrot.lane.b32.xlu0 %v645, 32
        %v1295 = vpop.permute.xlu0 %1294
        %1296 = vrot.lane.b32.xlu0 %v648, 32
        %v1297 = vpop.permute.xlu0 %1296
        %1298 = vrot.lane.b32.xlu0 %v650, 32
        %v1299 = vpop.permute.xlu0 %1298
        %1300 = vrot.lane.b32.xlu0 %v653, 32
        %v1301 = vpop.permute.xlu0 %1300
        %1302 = vrot.lane.b32.xlu0 %v655, 32
        %v1303 = vpop.permute.xlu0 %1302
        %1304 = vrot.lane.b32.xlu0 %v658, 32
        %v1305 = vpop.permute.xlu0 %1304
        %1306 = vrot.lane.b32.xlu0 %v660, 32
        %v1307 = vpop.permute.xlu0 %1306
        %1308 = vrot.lane.b32.xlu0 %v663, 32
        %v1309 = vpop.permute.xlu0 %1308
        %1310 = vrot.lane.b32.xlu0 %v665, 32
        %v1311 = vpop.permute.xlu0 %1310
        %1312 = vrot.lane.b32.xlu0 %v668, 32
        %v1313 = vpop.permute.xlu0 %1312
        %1314 = vrot.lane.b32.xlu0 %v670, 32
        %v1315 = vpop.permute.xlu0 %1314
        %1316 = vrot.lane.b32.xlu0 %v673, 32
        %v1317 = vpop.permute.xlu0 %1316
        %1318 = vrot.lane.b32.xlu0 %v675, 32
        %v1319 = vpop.permute.xlu0 %1318
        %1320 = vrot.lane.b32.xlu0 %v973, 32
        %v1321 = vpop.permute.xlu0 %1320
        %1322 = vrot.lane.b32.xlu0 %v975, 32
        %v1323 = vpop.permute.xlu0 %1322
        %1324 = vrot.lane.b32.xlu0 %v598, 32
        %v1325 = vpop.permute.xlu0 %1324
        %1326 = vrot.lane.b32.xlu0 %v600, 32
        %v1327 = vpop.permute.xlu0 %1326
        %vm1360 = vcmask 31744
        %v1361 = vsel %vm1360, %v352, %v500
        %v1362 = vsel %vm1360, %v254, %v502
        %v1363 = vsel %vm1360, %v353, %v504
        %v1364 = vsel %vm1360, %v257, %v506
        %v1365 = vsel %vm1360, %v354, %v508
        %v1366 = vsel %vm1360, %v260, %v510
        %v1367 = vsel %vm1360, %v355, %v512
        %v1368 = vsel %vm1360, %v263, %v514
        %v1369 = vsel %vm1360, %v356, %v516
        %v1370 = vsel %vm1360, %v266, %v518
        %v1371 = vsel %vm1360, %v357, %v520
        %v1372 = vsel %vm1360, %v269, %v522
        %v1373 = vsel %vm1360, %v358, %v524
        %v1374 = vsel %vm1360, %v272, %v526
        %v1375 = vsel %vm1360, %v359, %v528
        %v1376 = vsel %vm1360, %v275, %v530
        %v1377 = vsel %vm1360, %v360, %v532
        %v1378 = vsel %vm1360, %v278, %v534
        %v1379 = vsel %vm1360, %v361, %v536
        %v1380 = vsel %vm1360, %v281, %v538
        %v1381 = vsel %vm1360, %v362, %v540
        %v1382 = vsel %vm1360, %v284, %v542
        %v1383 = vsel %vm1360, %v363, %v544
        %v1384 = vsel %vm1360, %v287, %v546
        %v1385 = vsel %vm1360, %v364, %v548
        %v1386 = vsel %vm1360, %v290, %v550
        %v1387 = vsel %vm1360, %v365, %v552
        %v1388 = vsel %vm1360, %v293, %v554
        %v1389 = vsel %vm1360, %v366, %v556
        %v1390 = vsel %vm1360, %v296, %v558
        %v1391 = vsel %vm1360, %v367, %v560
        %v1392 = vsel %vm1360, %v299, %v562
        %vm1393 = vcmask 64512
        %v1394 = vsel %vm1393, %v1361, %v677
        %v1395 = vsel %vm1393, %v1362, %v679
        %v1396 = vsel %vm1393, %v1363, %v681
        %v1397 = vsel %vm1393, %v1364, %v683
        %v1398 = vsel %vm1393, %v1365, %v685
        %v1399 = vsel %vm1393, %v1366, %v687
        %v1400 = vsel %vm1393, %v1367, %v689
        %v1401 = vsel %vm1393, %v1368, %v691
        %v1402 = vsel %vm1393, %v1369, %v693
        %v1403 = vsel %vm1393, %v1370, %v695
        %v1404 = vsel %vm1393, %v1371, %v697
        %v1405 = vsel %vm1393, %v1372, %v699
        %v1406 = vsel %vm1393, %v1373, %v701
        %v1407 = vsel %vm1393, %v1374, %v703
        %v1408 = vsel %vm1393, %v1375, %v705
        %v1409 = vsel %vm1393, %v1376, %v707
        %v1410 = vsel %vm1393, %v1377, %v709
        %v1411 = vsel %vm1393, %v1378, %v711
        %v1412 = vsel %vm1393, %v1379, %v713
        %v1413 = vsel %vm1393, %v1380, %v715
        %v1414 = vsel %vm1393, %v1381, %v717
        %v1415 = vsel %vm1393, %v1382, %v719
        %v1416 = vsel %vm1393, %v1383, %v721
        %v1417 = vsel %vm1393, %v1384, %v723
        %v1418 = vsel %vm1393, %v1385, %v725
        %v1419 = vsel %vm1393, %v1386, %v727
        %v1420 = vsel %vm1393, %v1387, %v729
        %v1421 = vsel %vm1393, %v1388, %v731
        %v1422 = vsel %vm1393, %v1389, %v733
        %v1423 = vsel %vm1393, %v1390, %v735
        %v1424 = vsel %vm1393, %v1391, %v737
        %v1425 = vsel %vm1393, %v1392, %v739
        %vm1426 = vcmask 97280
        %v1427 = vsel %vm1426, %v1394, %v774
        %v1428 = vsel %vm1426, %v1395, %v776
        %v1429 = vsel %vm1426, %v1396, %v778
        %v1430 = vsel %vm1426, %v1397, %v780
        %v1431 = vsel %vm1426, %v1398, %v782
        %v1432 = vsel %vm1426, %v1399, %v784
        %v1433 = vsel %vm1426, %v1400, %v786
        %v1434 = vsel %vm1426, %v1401, %v788
        %v1435 = vsel %vm1426, %v1402, %v790
        %v1436 = vsel %vm1426, %v1403, %v792
        %v1437 = vsel %vm1426, %v1404, %v794
        %v1438 = vsel %vm1426, %v1405, %v796
        %v1439 = vsel %vm1426, %v1406, %v798
        %v1440 = vsel %vm1426, %v1407, %v800
        %v1441 = vsel %vm1426, %v1408, %v802
        %v1442 = vsel %vm1426, %v1409, %v804
        %v1443 = vsel %vm1426, %v1410, %v806
        %v1444 = vsel %vm1426, %v1411, %v808
        %v1445 = vsel %vm1426, %v1412, %v810
        %v1446 = vsel %vm1426, %v1413, %v812
        %v1447 = vsel %vm1426, %v1414, %v814
        %v1448 = vsel %vm1426, %v1415, %v816
        %v1449 = vsel %vm1426, %v1416, %v818
        %v1450 = vsel %vm1426, %v1417, %v820
        %v1451 = vsel %vm1426, %v1418, %v822
        %v1452 = vsel %vm1426, %v1419, %v824
        %v1453 = vsel %vm1426, %v1420, %v826
        %v1454 = vsel %vm1426, %v1421, %v828
        %v1455 = vsel %vm1426, %v1422, %v830
        %v1456 = vsel %vm1426, %v1423, %v832
        %v1457 = vsel %vm1426, %v1424, %v834
        %v1458 = vsel %vm1426, %v1425, %v836
        %vm1459 = vcmask 130048
        %v1460 = vsel %vm1459, %v1427, %v876
        %v1461 = vsel %vm1459, %v1428, %v878
        %v1462 = vsel %vm1459, %v1429, %v880
        %v1463 = vsel %vm1459, %v1430, %v882
        %v1464 = vsel %vm1459, %v1431, %v884
        %v1465 = vsel %vm1459, %v1432, %v886
        %v1466 = vsel %vm1459, %v1433, %v888
        %v1467 = vsel %vm1459, %v1434, %v890
        %v1468 = vsel %vm1459, %v1435, %v892
        %v1469 = vsel %vm1459, %v1436, %v894
        %v1470 = vsel %vm1459, %v1437, %v896
        %v1471 = vsel %vm1459, %v1438, %v898
        %v1472 = vsel %vm1459, %v1439, %v900
        %v1473 = vsel %vm1459, %v1440, %v902
        %v1474 = vsel %vm1459, %v1441, %v904
        %v1475 = vsel %vm1459, %v1442, %v906
        %v1476 = vsel %vm1459, %v1443, %v908
        %v1477 = vsel %vm1459, %v1444, %v910
        %v1478 = vsel %vm1459, %v1445, %v912
        %v1479 = vsel %vm1459, %v1446, %v914
        %v1480 = vsel %vm1459, %v1447, %v916
        %v1481 = vsel %vm1459, %v1448, %v918
        %v1482 = vsel %vm1459, %v1449, %v920
        %v1483 = vsel %vm1459, %v1450, %v922
        %v1484 = vsel %vm1459, %v1451, %v924
        %v1485 = vsel %vm1459, %v1452, %v926
        %v1486 = vsel %vm1459, %v1453, %v928
        %v1487 = vsel %vm1459, %v1454, %v930
        %v1488 = vsel %vm1459, %v1455, %v932
        %v1489 = vsel %vm1459, %v1456, %v934
        %v1490 = vsel %vm1459, %v1457, %v936
        %v1491 = vsel %vm1459, %v1458, %v938
        %vm1492 = vcmask 162816
        %v1493 = vsel %vm1492, %v1460, %v977
        %v1494 = vsel %vm1492, %v1461, %v979
        %v1495 = vsel %vm1492, %v1462, %v981
        %v1496 = vsel %vm1492, %v1463, %v983
        %v1497 = vsel %vm1492, %v1464, %v985
        %v1498 = vsel %vm1492, %v1465, %v987
        %v1499 = vsel %vm1492, %v1466, %v989
        %v1500 = vsel %vm1492, %v1467, %v991
        %v1501 = vsel %vm1492, %v1468, %v993
        %v1502 = vsel %vm1492, %v1469, %v995
        %v1503 = vsel %vm1492, %v1470, %v997
        %v1504 = vsel %vm1492, %v1471, %v999
        %v1505 = vsel %vm1492, %v1472, %v1001
        %v1506 = vsel %vm1492, %v1473, %v1003
        %v1507 = vsel %vm1492, %v1474, %v1005
        %v1508 = vsel %vm1492, %v1475, %v1007
        %v1509 = vsel %vm1492, %v1476, %v1009
        %v1510 = vsel %vm1492, %v1477, %v1011
        %v1511 = vsel %vm1492, %v1478, %v1013
        %v1512 = vsel %vm1492, %v1479, %v1015
        %v1513 = vsel %vm1492, %v1480, %v1017
        %v1514 = vsel %vm1492, %v1481, %v1019
        %v1515 = vsel %vm1492, %v1482, %v1021
        %v1516 = vsel %vm1492, %v1483, %v1023
        %v1517 = vsel %vm1492, %v1484, %v1025
        %v1518 = vsel %vm1492, %v1485, %v1027
        %v1519 = vsel %vm1492, %v1486, %v1029
        %v1520 = vsel %vm1492, %v1487, %v1031
        %v1521 = vsel %vm1492, %v1488, %v1033
        %v1522 = vsel %vm1492, %v1489, %v1035
        %v1523 = vsel %vm1492, %v1490, %v1037
        %v1524 = vsel %vm1492, %v1491, %v1039
        %vm1525 = vcmask 195584
        %v1526 = vsel %vm1525, %v1493, %v1073
        %v1527 = vsel %vm1525, %v1494, %v1075
        %v1528 = vsel %vm1525, %v1495, %v1077
        %v1529 = vsel %vm1525, %v1496, %v1079
        %v1530 = vsel %vm1525, %v1497, %v1081
        %v1531 = vsel %vm1525, %v1498, %v1083
        %v1532 = vsel %vm1525, %v1499, %v1085
        %v1533 = vsel %vm1525, %v1500, %v1087
        %v1534 = vsel %vm1525, %v1501, %v1089
        %v1535 = vsel %vm1525, %v1502, %v1091
        %v1536 = vsel %vm1525, %v1503, %v1093
        %v1537 = vsel %vm1525, %v1504, %v1095
        %v1538 = vsel %vm1525, %v1505, %v1097
        %v1539 = vsel %vm1525, %v1506, %v1099
        %v1540 = vsel %vm1525, %v1507, %v1101
        %v1541 = vsel %vm1525, %v1508, %v1103
        %v1542 = vsel %vm1525, %v1509, %v1105
        %v1543 = vsel %vm1525, %v1510, %v1107
        %v1544 = vsel %vm1525, %v1511, %v1109
        %v1545 = vsel %vm1525, %v1512, %v1111
        %v1546 = vsel %vm1525, %v1513, %v1113
        %v1547 = vsel %vm1525, %v1514, %v1115
        %v1548 = vsel %vm1525, %v1515, %v1117
        %v1549 = vsel %vm1525, %v1516, %v1119
        %v1550 = vsel %vm1525, %v1517, %v1121
        %v1551 = vsel %vm1525, %v1518, %v1123
        %v1552 = vsel %vm1525, %v1519, %v1125
        %v1553 = vsel %vm1525, %v1520, %v1127
        %v1554 = vsel %vm1525, %v1521, %v1129
        %v1555 = vsel %vm1525, %v1522, %v1131
        %v1556 = vsel %vm1525, %v1523, %v1133
        %v1557 = vsel %vm1525, %v1524, %v1135
        %vm1558 = vcmask 228352
        %v1559 = vsel %vm1558, %v1526, %v1169
        %v1560 = vsel %vm1558, %v1527, %v1171
        %v1561 = vsel %vm1558, %v1528, %v1173
        %v1562 = vsel %vm1558, %v1529, %v1175
        %v1563 = vsel %vm1558, %v1530, %v1177
        %v1564 = vsel %vm1558, %v1531, %v1179
        %v1565 = vsel %vm1558, %v1532, %v1181
        %v1566 = vsel %vm1558, %v1533, %v1183
        %v1567 = vsel %vm1558, %v1534, %v1185
        %v1568 = vsel %vm1558, %v1535, %v1187
        %v1569 = vsel %vm1558, %v1536, %v1189
        %v1570 = vsel %vm1558, %v1537, %v1191
        %v1571 = vsel %vm1558, %v1538, %v1193
        %v1572 = vsel %vm1558, %v1539, %v1195
        %v1573 = vsel %vm1558, %v1540, %v1197
        %v1574 = vsel %vm1558, %v1541, %v1199
        %v1575 = vsel %vm1558, %v1542, %v1201
        %v1576 = vsel %vm1558, %v1543, %v1203
        %v1577 = vsel %vm1558, %v1544, %v1205
        %v1578 = vsel %vm1558, %v1545, %v1207
        %v1579 = vsel %vm1558, %v1546, %v1209
        %v1580 = vsel %vm1558, %v1547, %v1211
        %v1581 = vsel %vm1558, %v1548, %v1213
        %v1582 = vsel %vm1558, %v1549, %v1215
        %v1583 = vsel %vm1558, %v1550, %v1217
        %v1584 = vsel %vm1558, %v1551, %v1219
        %v1585 = vsel %vm1558, %v1552, %v1221
        %v1586 = vsel %vm1558, %v1553, %v1223
        %v1587 = vsel %vm1558, %v1554, %v1225
        %v1588 = vsel %vm1558, %v1555, %v1227
        %v1589 = vsel %vm1558, %v1556, %v1229
        %v1590 = vsel %vm1558, %v1557, %v1231
        %vm1591 = vcmask 261120
        %v1592 = vsel %vm1591, %v1559, %v1265
        %v1593 = vsel %vm1591, %v1560, %v1267
        %v1594 = vsel %vm1591, %v1561, %v1269
        %v1595 = vsel %vm1591, %v1562, %v1271
        %v1596 = vsel %vm1591, %v1563, %v1273
        %v1597 = vsel %vm1591, %v1564, %v1275
        %v1598 = vsel %vm1591, %v1565, %v1277
        %v1599 = vsel %vm1591, %v1566, %v1279
        %v1600 = vsel %vm1591, %v1567, %v1281
        %v1601 = vsel %vm1591, %v1568, %v1283
        %v1602 = vsel %vm1591, %v1569, %v1285
        %v1603 = vsel %vm1591, %v1570, %v1287
        %v1604 = vsel %vm1591, %v1571, %v1289
        %v1605 = vsel %vm1591, %v1572, %v1291
        %v1606 = vsel %vm1591, %v1573, %v1293
        %v1607 = vsel %vm1591, %v1574, %v1295
        %v1608 = vsel %vm1591, %v1575, %v1297
        %v1609 = vsel %vm1591, %v1576, %v1299
        %v1610 = vsel %vm1591, %v1577, %v1301
        %v1611 = vsel %vm1591, %v1578, %v1303
        %v1612 = vsel %vm1591, %v1579, %v1305
        %v1613 = vsel %vm1591, %v1580, %v1307
        %v1614 = vsel %vm1591, %v1581, %v1309
        %v1615 = vsel %vm1591, %v1582, %v1311
        %v1616 = vsel %vm1591, %v1583, %v1313
        %v1617 = vsel %vm1591, %v1584, %v1315
        %v1618 = vsel %vm1591, %v1585, %v1317
        %v1619 = vsel %vm1591, %v1586, %v1319
        %v1620 = vsel %vm1591, %v1587, %v1321
        %v1621 = vsel %vm1591, %v1588, %v1323
        %v1622 = vsel %vm1591, %v1589, %v1325
        %v1623 = vsel %vm1591, %v1590, %v1327
        %vm1624 = vcmask 293888
        %v1626 = vsel %vm1624, %v1592, 0
        %v1629 = vsel %vm1624, %v1593, 0
        %v1632 = vsel %vm1624, %v1594, 0
        %v1635 = vsel %vm1624, %v1595, 0
        %v1638 = vsel %vm1624, %v1596, 0
        %v1641 = vsel %vm1624, %v1597, 0
        %v1644 = vsel %vm1624, %v1598, 0
        %v1647 = vsel %vm1624, %v1599, 0
        %v1650 = vsel %vm1624, %v1600, 0
        %v1653 = vsel %vm1624, %v1601, 0
        %v1656 = vsel %vm1624, %v1602, 0
        %v1659 = vsel %vm1624, %v1603, 0
        %v1662 = vsel %vm1624, %v1604, 0
        %v1665 = vsel %vm1624, %v1605, 0
        %v1668 = vsel %vm1624, %v1606, 0
        %v1671 = vsel %vm1624, %v1607, 0
        %v1674 = vsel %vm1624, %v1608, 0
        %v1677 = vsel %vm1624, %v1609, 0
        %v1680 = vsel %vm1624, %v1610, 0
        %v1683 = vsel %vm1624, %v1611, 0
        %v1686 = vsel %vm1624, %v1612, 0
        %v1689 = vsel %vm1624, %v1613, 0
        %v1692 = vsel %vm1624, %v1614, 0
        %v1695 = vsel %vm1624, %v1615, 0
        %v1698 = vsel %vm1624, %v1616, 0
        %v1701 = vsel %vm1624, %v1617, 0
        %v1704 = vsel %vm1624, %v1618, 0
        %v1707 = vsel %vm1624, %v1619, 0
        %v1710 = vsel %vm1624, %v1620, 0
        %v1713 = vsel %vm1624, %v1621, 0
        %v1716 = vsel %vm1624, %v1622, 0
        %v1719 = vsel %vm1624, %v1623, 0
        %vm1721 = vcmask 1043456
        %v1723 = vsel %vm1721, %v218, 0
        %1725 = vmatprep.subr.mxu0 0.0
        %1726 = vmatpush1.msra.mxu0 %v214
        %1727 = vmatprep.subr.mxu0 0.0
        %1728 = vmatpush1.msra.mxu0 %v215
        %1729 = vmatprep.subr.mxu0 0.0
        %1730 = vmatpush1.msra.mxu0 %v216
        %1731 = vmatprep.subr.mxu0 0.0
        %1732 = vmatpush1.msra.mxu0 %v217
        %1733 = vmatprep.subr.mxu0 0.0
        %1734 = vmatpush1.msra.mxu0 %v1723
        %1735 = vmatprep.subr.mxu0 0.0
        %1736 = vmatpush1.msra.mxu0 0.0
        %1737 = vmatprep.subr.mxu0 0.0
        %1738 = vmatpush1.msra.mxu0 0.0
        %1739 = vmatprep.subr.mxu0 0.0
        %1740 = vmatpush1.msra.mxu0 0.0
        %1741 = vmatprep.subr.mxu0 0.0
        %1742 = vmatpush1.msra.mxu0 0.0
        %1743 = vmatprep.subr.mxu0 0.0
        %1744 = vmatpush1.msra.mxu0 0.0
        %1745 = vmatprep.subr.mxu0 0.0
        %1746 = vmatpush1.msra.mxu0 0.0
        %1747 = vmatprep.subr.mxu0 0.0
        %1748 = vmatpush1.msra.mxu0 0.0
        %1749 = vmatprep.subr.mxu0 0.0
        %1750 = vmatpush1.msra.mxu0 0.0
        %1751 = vmatprep.subr.mxu0 0.0
        %1752 = vmatpush1.msra.mxu0 0.0
        %1753 = vmatprep.subr.mxu0 0.0
        %1754 = vmatpush1.msra.mxu0 0.0
        %1755 = vmatprep.subr.mxu0 0.0
        %1756 = vmatpush1.msra.mxu0 0.0
        %1757 = vmatprep.subr.mxu0 0.0
        %1758 = vmatpush1.msra.mxu0 0.0
        %1759 = vmatprep.subr.mxu0 0.0
        %1760 = vmatpush1.msra.mxu0 0.0
        %1761 = vmatprep.subr.mxu0 0.0
        %1762 = vmatpush1.msra.mxu0 0.0
        %1763 = vmatprep.subr.mxu0 0.0
        %1764 = vmatpush1.msra.mxu0 0.0
        %1765 = vmatprep.subr.mxu0 0.0
        %1766 = vmatpush1.msra.mxu0 0.0
        %1767 = vmatprep.subr.mxu0 0.0
        %1768 = vmatpush1.msra.mxu0 0.0
        %1769 = vmatprep.subr.mxu0 0.0
        %1770 = vmatpush1.msra.mxu0 0.0
        %1771 = vmatprep.subr.mxu0 0.0
        %1772 = vmatpush1.msra.mxu0 0.0
        %1773 = vmatprep.subr.mxu0 0.0
        %1774 = vmatpush1.msra.mxu0 0.0
        %1775 = vmatprep.subr.mxu0 0.0
        %1776 = vmatpush1.msra.mxu0 0.0
        %1777 = vmatprep.subr.mxu0 0.0
        %1778 = vmatpush1.msra.mxu0 0.0
        %1779 = vmatprep.subr.mxu0 0.0
        %1780 = vmatpush1.msra.mxu0 0.0
        %1781 = vmatprep.subr.mxu0 0.0
        %1782 = vmatpush1.msra.mxu0 0.0
        %1783 = vmatprep.subr.mxu0 0.0
        %1784 = vmatpush1.msra.mxu0 0.0
        %1785 = vmatprep.subr.mxu0 0.0
        %1786 = vmatpush1.msra.mxu0 0.0
        %1787 = vmatprep.subr.mxu0 0.0
        %1788 = vmatpush1.msra.mxu0 0.0
        %1789 = vmatprep.mubr.f32.mxu0 0.0
        %1790 = vmatmul.mubr.f32.gmra.mrb[0].mxu0 %v1626
        %v1791 = vpop.f32.mrb[0].mxu0
        %v1792 = vadd.f32 0.0, %v1791
        %v1793 = vpop.f32.mrb[0].mxu0
        %1794 = vmatprep.mubr.f32.mxu0 0.0
        %1795 = vmatmul.mubr.f32.gmra.mrb[0].mxu0 %v1629
        %v1796 = vpop.f32.mrb[0].mxu0
        %v1797 = vadd.f32 0.0, %v1796
        %v1798 = vpop.f32.mrb[0].mxu0
        %1799 = vmatprep.mubr.f32.mxu0 0.0
        %1800 = vmatmul.mubr.f32.gmra.mrb[0].mxu0 %v1632
        %v1801 = vpop.f32.mrb[0].mxu0
        %v1802 = vadd.f32 0.0, %v1801
        %v1803 = vpop.f32.mrb[0].mxu0
        %1804 = vmatprep.mubr.f32.mxu0 0.0
        %1805 = vmatmul.mubr.f32.gmra.mrb[0].mxu0 %v1635
        %v1806 = vpop.f32.mrb[0].mxu0
        %v1807 = vadd.f32 0.0, %v1806
        %v1808 = vpop.f32.mrb[0].mxu0
        %1809 = vmatprep.mubr.f32.mxu0 0.0
        %1810 = vmatmul.mubr.f32.gmra.mrb[0].mxu0 %v1638
        %v1811 = vpop.f32.mrb[0].mxu0
        %v1812 = vadd.f32 0.0, %v1811
        %v1813 = vpop.f32.mrb[0].mxu0
        %1814 = vmatprep.mubr.f32.mxu0 0.0
        %1815 = vmatmul.mubr.f32.gmra.mrb[0].mxu0 %v1641
        %v1816 = vpop.f32.mrb[0].mxu0
        %v1817 = vadd.f32 0.0, %v1816
        %v1818 = vpop.f32.mrb[0].mxu0
        %1819 = vmatprep.mubr.f32.mxu0 0.0
        %1820 = vmatmul.mubr.f32.gmra.mrb[0].mxu0 %v1644
        %v1821 = vpop.f32.mrb[0].mxu0
        %v1822 = vadd.f32 0.0, %v1821
        %v1823 = vpop.f32.mrb[0].mxu0
        %1824 = vmatprep.mubr.f32.mxu0 0.0
        %1825 = vmatmul.mubr.f32.gmra.mrb[0].mxu0 %v1647
        %v1826 = vpop.f32.mrb[0].mxu0
        %v1827 = vadd.f32 0.0, %v1826
        %v1828 = vpop.f32.mrb[0].mxu0
        %1829 = vmatprep.mubr.f32.mxu0 0.0
        %1830 = vmatmul.mubr.f32.gmra.mrb[0].mxu0 %v1650
        %v1831 = vpop.f32.mrb[0].mxu0
        %v1832 = vadd.f32 0.0, %v1831
        %v1833 = vpop.f32.mrb[0].mxu0
        %1834 = vmatprep.mubr.f32.mxu0 0.0
        %1835 = vmatmul.mubr.f32.gmra.mrb[0].mxu0 %v1653
        %v1836 = vpop.f32.mrb[0].mxu0
        %v1837 = vadd.f32 0.0, %v1836
        %v1838 = vpop.f32.mrb[0].mxu0
        %1839 = vmatprep.mubr.f32.mxu0 0.0
        %1840 = vmatmul.mubr.f32.gmra.mrb[0].mxu0 %v1656
        %v1841 = vpop.f32.mrb[0].mxu0
        %v1842 = vadd.f32 0.0, %v1841
        %v1843 = vpop.f32.mrb[0].mxu0
        %1844 = vmatprep.mubr.f32.mxu0 0.0
        %1845 = vmatmul.mubr.f32.gmra.mrb[0].mxu0 %v1659
        %v1846 = vpop.f32.mrb[0].mxu0
        %v1847 = vadd.f32 0.0, %v1846
        %v1848 = vpop.f32.mrb[0].mxu0
        %1849 = vmatprep.mubr.f32.mxu0 0.0
        %1850 = vmatmul.mubr.f32.gmra.mrb[0].mxu0 %v1662
        %v1851 = vpop.f32.mrb[0].mxu0
        %v1852 = vadd.f32 0.0, %v1851
        %v1853 = vpop.f32.mrb[0].mxu0
        %1854 = vmatprep.mubr.f32.mxu0 0.0
        %1855 = vmatmul.mubr.f32.gmra.mrb[0].mxu0 %v1665
        %v1856 = vpop.f32.mrb[0].mxu0
        %v1857 = vadd.f32 0.0, %v1856
        %v1858 = vpop.f32.mrb[0].mxu0
        %1859 = vmatprep.mubr.f32.mxu0 0.0
        %1860 = vmatmul.mubr.f32.gmra.mrb[0].mxu0 %v1668
        %v1861 = vpop.f32.mrb[0].mxu0
        %v1862 = vadd.f32 0.0, %v1861
        %v1863 = vpop.f32.mrb[0].mxu0
        %1864 = vmatprep.mubr.f32.mxu0 0.0
        %1865 = vmatmul.mubr.f32.gmra.mrb[0].mxu0 %v1671
        %v1866 = vpop.f32.mrb[0].mxu0
        %v1867 = vadd.f32 0.0, %v1866
        %v1868 = vpop.f32.mrb[0].mxu0
        %1869 = vmatprep.mubr.f32.mxu0 0.0
        %1870 = vmatmul.mubr.f32.gmra.mrb[0].mxu0 %v1674
        %v1871 = vpop.f32.mrb[0].mxu0
        %v1872 = vadd.f32 0.0, %v1871
        %v1873 = vpop.f32.mrb[0].mxu0
        %1874 = vmatprep.mubr.f32.mxu0 0.0
        %1875 = vmatmul.mubr.f32.gmra.mrb[0].mxu0 %v1677
        %v1876 = vpop.f32.mrb[0].mxu0
        %v1877 = vadd.f32 0.0, %v1876
        %v1878 = vpop.f32.mrb[0].mxu0
        %1879 = vmatprep.mubr.f32.mxu0 0.0
        %1880 = vmatmul.mubr.f32.gmra.mrb[0].mxu0 %v1680
        %v1881 = vpop.f32.mrb[0].mxu0
        %v1882 = vadd.f32 0.0, %v1881
        %v1883 = vpop.f32.mrb[0].mxu0
        %1884 = vmatprep.mubr.f32.mxu0 0.0
        %1885 = vmatmul.mubr.f32.gmra.mrb[0].mxu0 %v1683
        %v1886 = vpop.f32.mrb[0].mxu0
        %v1887 = vadd.f32 0.0, %v1886
        %v1888 = vpop.f32.mrb[0].mxu0
        %1889 = vmatprep.mubr.f32.mxu0 0.0
        %1890 = vmatmul.mubr.f32.gmra.mrb[0].mxu0 %v1686
        %v1891 = vpop.f32.mrb[0].mxu0
        %v1892 = vadd.f32 0.0, %v1891
        %v1893 = vpop.f32.mrb[0].mxu0
        %1894 = vmatprep.mubr.f32.mxu0 0.0
        %1895 = vmatmul.mubr.f32.gmra.mrb[0].mxu0 %v1689
        %v1896 = vpop.f32.mrb[0].mxu0
        %v1897 = vadd.f32 0.0, %v1896
        %v1898 = vpop.f32.mrb[0].mxu0
        %1899 = vmatprep.mubr.f32.mxu0 0.0
        %1900 = vmatmul.mubr.f32.gmra.mrb[0].mxu0 %v1692
        %v1901 = vpop.f32.mrb[0].mxu0
        %v1902 = vadd.f32 0.0, %v1901
        %v1903 = vpop.f32.mrb[0].mxu0
        %1904 = vmatprep.mubr.f32.mxu0 0.0
        %1905 = vmatmul.mubr.f32.gmra.mrb[0].mxu0 %v1695
        %v1906 = vpop.f32.mrb[0].mxu0
        %v1907 = vadd.f32 0.0, %v1906
        %v1908 = vpop.f32.mrb[0].mxu0
        %1909 = vmatprep.mubr.f32.mxu0 0.0
        %1910 = vmatmul.mubr.f32.gmra.mrb[0].mxu0 %v1698
        %v1911 = vpop.f32.mrb[0].mxu0
        %v1912 = vadd.f32 0.0, %v1911
        %v1913 = vpop.f32.mrb[0].mxu0
        %1914 = vmatprep.mubr.f32.mxu0 0.0
        %1915 = vmatmul.mubr.f32.gmra.mrb[0].mxu0 %v1701
        %v1916 = vpop.f32.mrb[0].mxu0
        %v1917 = vadd.f32 0.0, %v1916
        %v1918 = vpop.f32.mrb[0].mxu0
        %1919 = vmatprep.mubr.f32.mxu0 0.0
        %1920 = vmatmul.mubr.f32.gmra.mrb[0].mxu0 %v1704
        %v1921 = vpop.f32.mrb[0].mxu0
        %v1922 = vadd.f32 0.0, %v1921
        %v1923 = vpop.f32.mrb[0].mxu0
        %1924 = vmatprep.mubr.f32.mxu0 0.0
        %1925 = vmatmul.mubr.f32.gmra.mrb[0].mxu0 %v1707
        %v1926 = vpop.f32.mrb[0].mxu0
        %v1927 = vadd.f32 0.0, %v1926
        %v1928 = vpop.f32.mrb[0].mxu0
        %1929 = vmatprep.mubr.f32.mxu0 0.0
        %1930 = vmatmul.mubr.f32.gmra.mrb[0].mxu0 %v1710
        %v1931 = vpop.f32.mrb[0].mxu0
        %v1932 = vadd.f32 0.0, %v1931
        %v1933 = vpop.f32.mrb[0].mxu0
        %1934 = vmatprep.mubr.f32.mxu0 0.0
        %1935 = vmatmul.mubr.f32.gmra.mrb[0].mxu0 %v1713
        %v1936 = vpop.f32.mrb[0].mxu0
        %v1937 = vadd.f32 0.0, %v1936
        %v1938 = vpop.f32.mrb[0].mxu0
        %1939 = vmatprep.mubr.f32.mxu0 0.0
        %1940 = vmatmul.mubr.f32.gmra.mrb[0].mxu0 %v1716
        %v1941 = vpop.f32.mrb[0].mxu0
        %v1942 = vadd.f32 0.0, %v1941
        %v1943 = vpop.f32.mrb[0].mxu0
        %1944 = vmatprep.mubr.f32.mxu0 0.0
        %1945 = vmatmul.mubr.f32.gmra.mrb[0].mxu0 %v1719
        %v1946 = vpop.f32.mrb[0].mxu0
        %v1947 = vadd.f32 0.0, %v1946
        %v1948 = vpop.f32.mrb[0].mxu0
        %1949 = vdwg.mxu0
        %1950 = vst.msk [vmem:[%s181] sm:$0xff] %vm1360, %v1792
        %1951 = vst.msk [vmem:[%s181 + $0x8] sm:$0xff] %vm1360, %v1797
        %1952 = vst.msk [vmem:[%s181 + $0x10] sm:$0xff] %vm1360, %v1802
        %1953 = vst.msk [vmem:[%s181 + $0x18] sm:$0xff] %vm1360, %v1807
        %1954 = vst.msk [vmem:[%s181 + $0x20] sm:$0xff] %vm1360, %v1812
        %1955 = vst.msk [vmem:[%s181 + $0x28] sm:$0xff] %vm1360, %v1817
        %1956 = vst.msk [vmem:[%s181 + $0x30] sm:$0xff] %vm1360, %v1822
        %1957 = vst.msk [vmem:[%s181 + $0x38] sm:$0xff] %vm1360, %v1827
        %1958 = vst.msk [vmem:[%s181 + $0x40] sm:$0xff] %vm1360, %v1832
        %1959 = vst.msk [vmem:[%s181 + $0x48] sm:$0xff] %vm1360, %v1837
        %1960 = vst.msk [vmem:[%s181 + $0x50] sm:$0xff] %vm1360, %v1842
        %1961 = vst.msk [vmem:[%s181 + $0x58] sm:$0xff] %vm1360, %v1847
        %1962 = vst.msk [vmem:[%s181 + $0x60] sm:$0xff] %vm1360, %v1852
        %1963 = vst.msk [vmem:[%s181 + $0x68] sm:$0xff] %vm1360, %v1857
        %1964 = vst.msk [vmem:[%s181 + $0x70] sm:$0xff] %vm1360, %v1862
        %1965 = vst.msk [vmem:[%s181 + $0x78] sm:$0xff] %vm1360, %v1867
        %1966 = vst.msk [vmem:[%s181 + $0x80] sm:$0xff] %vm1360, %v1872
        %1967 = vst.msk [vmem:[%s181 + $0x88] sm:$0xff] %vm1360, %v1877
        %1968 = vst.msk [vmem:[%s181 + $0x90] sm:$0xff] %vm1360, %v1882
        %1969 = vst.msk [vmem:[%s181 + $0x98] sm:$0xff] %vm1360, %v1887
        %1970 = vst.msk [vmem:[%s181 + $0xa0] sm:$0xff] %vm1360, %v1892
        %1971 = vst.msk [vmem:[%s181 + $0xa8] sm:$0xff] %vm1360, %v1897
        %1972 = vst.msk [vmem:[%s181 + $0xb0] sm:$0xff] %vm1360, %v1902
        %1973 = vst.msk [vmem:[%s181 + $0xb8] sm:$0xff] %vm1360, %v1907
        %1974 = vst.msk [vmem:[%s181 + $0xc0] sm:$0xff] %vm1360, %v1912
        %1975 = vst.msk [vmem:[%s181 + $0xc8] sm:$0xff] %vm1360, %v1917
        %1976 = vst.msk [vmem:[%s181 + $0xd0] sm:$0xff] %vm1360, %v1922
        %1977 = vst.msk [vmem:[%s181 + $0xd8] sm:$0xff] %vm1360, %v1927
        %1978 = vst.msk [vmem:[%s181 + $0xe0] sm:$0xff] %vm1360, %v1932
        %1979 = vst.msk [vmem:[%s181 + $0xe8] sm:$0xff] %vm1360, %v1937
        %1980 = vst.msk [vmem:[%s181 + $0xf0] sm:$0xff] %vm1360, %v1942
        %1981 = vst.msk [vmem:[%s181 + $0xf8] sm:$0xff] %vm1360, %v1947
        %v1982 = vsel %vm1360, %v1792, 0.0
        %v1983 = vsel %vm1360, %v1797, 0.0
        %v1984 = vadd.f32 %v1982, %v1983
        %v1985 = vsel %vm1360, %v1802, 0.0
        %v1986 = vadd.f32 %v1984, %v1985
        %v1987 = vsel %vm1360, %v1807, 0.0
        %v1988 = vadd.f32 %v1986, %v1987
        %v1989 = vsel %vm1360, %v1812, 0.0
        %v1990 = vadd.f32 %v1988, %v1989
        %v1991 = vsel %vm1360, %v1817, 0.0
        %v1992 = vadd.f32 %v1990, %v1991
        %v1993 = vsel %vm1360, %v1822, 0.0
        %v1994 = vadd.f32 %v1992, %v1993
        %v1995 = vsel %vm1360, %v1827, 0.0
        %v1996 = vadd.f32 %v1994, %v1995
        %v1997 = vsel %vm1360, %v1832, 0.0
        %v1998 = vadd.f32 %v1996, %v1997
        %v1999 = vsel %vm1360, %v1837, 0.0
        %v2000 = vadd.f32 %v1998, %v1999
        %v2001 = vsel %vm1360, %v1842, 0.0
        %v2002 = vadd.f32 %v2000, %v2001
        %v2003 = vsel %vm1360, %v1847, 0.0
        %v2004 = vadd.f32 %v2002, %v2003
        %v2005 = vsel %vm1360, %v1852, 0.0
        %v2006 = vadd.f32 %v2004, %v2005
        %v2007 = vsel %vm1360, %v1857, 0.0
        %v2008 = vadd.f32 %v2006, %v2007
        %v2009 = vsel %vm1360, %v1862, 0.0
        %v2010 = vadd.f32 %v2008, %v2009
        %v2011 = vsel %vm1360, %v1867, 0.0
        %v2012 = vadd.f32 %v2010, %v2011
        %v2013 = vsel %vm1360, %v1872, 0.0
        %v2014 = vadd.f32 %v2012, %v2013
        %v2015 = vsel %vm1360, %v1877, 0.0
        %v2016 = vadd.f32 %v2014, %v2015
        %v2017 = vsel %vm1360, %v1882, 0.0
        %v2018 = vadd.f32 %v2016, %v2017
        %v2019 = vsel %vm1360, %v1887, 0.0
        %v2020 = vadd.f32 %v2018, %v2019
        %v2021 = vsel %vm1360, %v1892, 0.0
        %v2022 = vadd.f32 %v2020, %v2021
        %v2023 = vsel %vm1360, %v1897, 0.0
        %v2024 = vadd.f32 %v2022, %v2023
        %v2025 = vsel %vm1360, %v1902, 0.0
        %v2026 = vadd.f32 %v2024, %v2025
        %v2027 = vsel %vm1360, %v1907, 0.0
        %v2028 = vadd.f32 %v2026, %v2027
        %v2029 = vsel %vm1360, %v1912, 0.0
        %v2030 = vadd.f32 %v2028, %v2029
        %v2031 = vsel %vm1360, %v1917, 0.0
        %v2032 = vadd.f32 %v2030, %v2031
        %v2033 = vsel %vm1360, %v1922, 0.0
        %v2034 = vadd.f32 %v2032, %v2033
        %v2035 = vsel %vm1360, %v1927, 0.0
        %v2036 = vadd.f32 %v2034, %v2035
        %v2037 = vsel %vm1360, %v1932, 0.0
        %v2038 = vadd.f32 %v2036, %v2037
        %v2039 = vsel %vm1360, %v1937, 0.0
        %v2040 = vadd.f32 %v2038, %v2039
        %v2041 = vsel %vm1360, %v1942, 0.0
        %v2042 = vadd.f32 %v2040, %v2041
        %v2043 = vsel %vm1360, %v1947, 0.0
        %v2044 = vadd.f32 %v2042, %v2043
        %v2045 = vrot.slane %v2044, 4
        %v2046 = vadd.f32 %v2044, %v2045
        %v2047 = vrot.slane %v2046, 2
        %v2048 = vadd.f32 %v2046, %v2047
        %v2049 = vrot.slane %v2048, 1
        %v2050 = vadd.f32 %v2048, %v2049
        %vm2051 = vcmask 24576
        %2052 = vst.msk [vmem:[%s171] sm:$0x1] %vm2051, %v2050
        %v2053 = vmul.f32 %v1792, %v1792
        %v2054 = vmul.f32 %v1797, %v1797
        %v2055 = vmul.f32 %v1802, %v1802
        %v2056 = vmul.f32 %v1807, %v1807
        %v2057 = vmul.f32 %v1812, %v1812
        %v2058 = vmul.f32 %v1817, %v1817
        %v2059 = vmul.f32 %v1822, %v1822
        %v2060 = vmul.f32 %v1827, %v1827
        %v2061 = vmul.f32 %v1832, %v1832
        %v2062 = vmul.f32 %v1837, %v1837
        %v2063 = vmul.f32 %v1842, %v1842
        %v2064 = vmul.f32 %v1847, %v1847
        %v2065 = vmul.f32 %v1852, %v1852
        %v2066 = vmul.f32 %v1857, %v1857
        %v2067 = vmul.f32 %v1862, %v1862
        %v2068 = vmul.f32 %v1867, %v1867
        %v2069 = vmul.f32 %v1872, %v1872
        %v2070 = vmul.f32 %v1877, %v1877
        %v2071 = vmul.f32 %v1882, %v1882
        %v2072 = vmul.f32 %v1887, %v1887
        %v2073 = vmul.f32 %v1892, %v1892
        %v2074 = vmul.f32 %v1897, %v1897
        %v2075 = vmul.f32 %v1902, %v1902
        %v2076 = vmul.f32 %v1907, %v1907
        %v2077 = vmul.f32 %v1912, %v1912
        %v2078 = vmul.f32 %v1917, %v1917
        %v2079 = vmul.f32 %v1922, %v1922
        %v2080 = vmul.f32 %v1927, %v1927
        %v2081 = vmul.f32 %v1932, %v1932
        %v2082 = vmul.f32 %v1937, %v1937
        %v2083 = vmul.f32 %v1942, %v1942
        %v2084 = vmul.f32 %v1947, %v1947
        %v2085 = vsel %vm1360, %v2053, 0.0
        %v2086 = vsel %vm1360, %v2054, 0.0
        %v2087 = vadd.f32 %v2085, %v2086
        %v2088 = vsel %vm1360, %v2055, 0.0
        %v2089 = vadd.f32 %v2087, %v2088
        %v2090 = vsel %vm1360, %v2056, 0.0
        %v2091 = vadd.f32 %v2089, %v2090
        %v2092 = vsel %vm1360, %v2057, 0.0
        %v2093 = vadd.f32 %v2091, %v2092
        %v2094 = vsel %vm1360, %v2058, 0.0
        %v2095 = vadd.f32 %v2093, %v2094
        %v2096 = vsel %vm1360, %v2059, 0.0
        %v2097 = vadd.f32 %v2095, %v2096
        %v2098 = vsel %vm1360, %v2060, 0.0
        %v2099 = vadd.f32 %v2097, %v2098
        %v2100 = vsel %vm1360, %v2061, 0.0
        %v2101 = vadd.f32 %v2099, %v2100
        %v2102 = vsel %vm1360, %v2062, 0.0
        %v2103 = vadd.f32 %v2101, %v2102
        %v2104 = vsel %vm1360, %v2063, 0.0
        %v2105 = vadd.f32 %v2103, %v2104
        %v2106 = vsel %vm1360, %v2064, 0.0
        %v2107 = vadd.f32 %v2105, %v2106
        %v2108 = vsel %vm1360, %v2065, 0.0
        %v2109 = vadd.f32 %v2107, %v2108
        %v2110 = vsel %vm1360, %v2066, 0.0
        %v2111 = vadd.f32 %v2109, %v2110
        %v2112 = vsel %vm1360, %v2067, 0.0
        %v2113 = vadd.f32 %v2111, %v2112
        %v2114 = vsel %vm1360, %v2068, 0.0
        %v2115 = vadd.f32 %v2113, %v2114
        %v2116 = vsel %vm1360, %v2069, 0.0
        %v2117 = vadd.f32 %v2115, %v2116
        %v2118 = vsel %vm1360, %v2070, 0.0
        %v2119 = vadd.f32 %v2117, %v2118
        %v2120 = vsel %vm1360, %v2071, 0.0
        %v2121 = vadd.f32 %v2119, %v2120
        %v2122 = vsel %vm1360, %v2072, 0.0
        %v2123 = vadd.f32 %v2121, %v2122
        %v2124 = vsel %vm1360, %v2073, 0.0
        %v2125 = vadd.f32 %v2123, %v2124
        %v2126 = vsel %vm1360, %v2074, 0.0
        %v2127 = vadd.f32 %v2125, %v2126
        %v2128 = vsel %vm1360, %v2075, 0.0
        %v2129 = vadd.f32 %v2127, %v2128
        %v2130 = vsel %vm1360, %v2076, 0.0
        %v2131 = vadd.f32 %v2129, %v2130
        %v2132 = vsel %vm1360, %v2077, 0.0
        %v2133 = vadd.f32 %v2131, %v2132
        %v2134 = vsel %vm1360, %v2078, 0.0
        %v2135 = vadd.f32 %v2133, %v2134
        %v2136 = vsel %vm1360, %v2079, 0.0
        %v2137 = vadd.f32 %v2135, %v2136
        %v2138 = vsel %vm1360, %v2080, 0.0
        %v2139 = vadd.f32 %v2137, %v2138
        %v2140 = vsel %vm1360, %v2081, 0.0
        %v2141 = vadd.f32 %v2139, %v2140
        %v2142 = vsel %vm1360, %v2082, 0.0
        %v2143 = vadd.f32 %v2141, %v2142
        %v2144 = vsel %vm1360, %v2083, 0.0
        %v2145 = vadd.f32 %v2143, %v2144
        %v2146 = vsel %vm1360, %v2084, 0.0
        %v2147 = vadd.f32 %v2145, %v2146
        %v2148 = vrot.slane %v2147, 4
        %v2149 = vadd.f32 %v2147, %v2148
        %v2150 = vrot.slane %v2149, 2
        %v2151 = vadd.f32 %v2149, %v2150
        %v2152 = vrot.slane %v2151, 1
        %v2153 = vadd.f32 %v2151, %v2152
        %2154 = vst.msk [vmem:[%s171 + $0x1] sm:$0x1] %vm2051, %v2153
        %p2155 = scmp.lt.s32.totalorder %s18, 1
        %s2156 = scalar_select %p2155, %s18, 1
        %s2157 = smul.addr %s2156, 32
        %s2158 = smul.addr %s2157, 8
        %s2159 = scalar_lea.vmem %s2, %s2158
        %s2160 = sand.u32 %s99, 1
        %s2161 = scalar_lea.sflag [#allocation3], %s2160
        %s2162 = sand.u32 %s99, 1
        %s2163 = smul.addr %s2162, 2
        %s2164 = scalar_lea.vmem [#allocation2], %s2163
        // Predicated region
        $region29: #{tpu_custom_call.1} parent=27 // pred_check
          %p2165 = pneg %p83
        $region30: #{tpu_custom_call.1} parent=27 // pred_check_branch
          %2167 = sbr.rel (%p2165) target = $region32
        $region31: #{tpu_custom_call.1} parent=27 // pred_region
          _
        $region32: #{tpu_custom_call.1} parent=27 // pred_fallthru
          _
        // Predicated region
        $region33: #{tpu_custom_call.1} parent=27 // pred_check
          %p2168 = pneg %p109
        $region34: #{tpu_custom_call.1} parent=27 // pred_check_branch
          %2170 = sbr.rel (%p2168) target = $region36
        $region35: #{tpu_custom_call.1} parent=27 // pred_region
          %s2172 = ssub.s32 32, 32
          %2173 = vsyncadd %s2161, %s2172
          %s2174 = smul.addr %s18, 32
          %s2175 = scalar_lea.hbm %s3, %s2174
          %s2177 = sshll.u32 %s2164, 4
          %s2178 = int_to_ptr.vmem [resolvable:$true] %s2177
          %2180 = dma.vmem_to_hbm [thread:$0]  %s2178, 32, %s2175, %s2161
        $region36: #{tpu_custom_call.1} parent=27 // pred_fallthru
          _
      $region28: #{tpu_custom_call.1} parent=5 // pred_fallthru
        _
      %p2181 = scmp.le.s32.totalorder 2, %s13
      // Predicated region
      $region37: #{tpu_custom_call.1} parent=5 // pred_check
        %p2182 = pneg %p2181
      $region38: #{tpu_custom_call.1} parent=5 // pred_check_branch
        %2184 = sbr.rel (%p2182) target = $region40
      $region39: #{tpu_custom_call.1} parent=5 // pred_region
        %s2185 = ssub.s32 %s13, 2
        // Predicated region
        $region41: #{tpu_custom_call.1} parent=39 // pred_check
          %p2186 = pneg %p89
        $region42: #{tpu_custom_call.1} parent=39 // pred_check_branch
          %2188 = sbr.rel (%p2186) target = $region44
        $region43: #{tpu_custom_call.1} parent=39 // pred_region
          %p2189 = scmp.lt.s32.totalorder %s19, 1
          %s2190 = scalar_select %p2189, %s19, 1
          %s2191 = smul.addr %s2190, 32
          %s2192 = smul.addr %s2191, 8
          %s2193 = scalar_lea.vmem %s2, %s2192
        $region44: #{tpu_custom_call.1} parent=39 // pred_fallthru
          _
        // Predicated region
        $region45: #{tpu_custom_call.1} parent=39 // pred_check
          %p2194 = pneg %p115
        $region46: #{tpu_custom_call.1} parent=39 // pred_check_branch
          %2196 = sbr.rel (%p2194) target = $region48
        $region47: #{tpu_custom_call.1} parent=39 // pred_region
          %s2197 = sand.u32 %s100, 1
          %s2198 = scalar_lea.sflag [#allocation3], %s2197
          %s2199 = sand.u32 %s100, 1
          %s2200 = smul.addr %s2199, 2
          %s2201 = scalar_lea.vmem [#allocation2], %s2200
          %2202 = dma.done %s2198, 32
        $region48: #{tpu_custom_call.1} parent=39 // pred_fallthru
          _
      $region40: #{tpu_custom_call.1} parent=5 // pred_fallthru
        _
    $region6: #{tpu_custom_call.1} parent=1 // loop_footer
      %s17 = sadd.s32 1, %s13
    $region7: #{tpu_custom_call.1} parent=1 // loop_footer_branch
      %12 = sbr.rel target = $region3
    $region8: #{tpu_custom_call.1} parent=1 // loop_exit
      _
    %2203 = vsyncpa [#allocation3], 1
    %s2204 = scalar_lea.sflag [#allocation3], 1
    %2205 = vsyncpa %s2204, 1

</llo_original>
